<compile_context>
chip_gen: v6e
topology: v6e:2x2x1
jax: 0.10.0
libtpu: 0.0.40
codegen_flags: <defaults>
</compile_context>

<pallas_src>
import functools

import numpy as np
import jax
import jax.numpy as jnp
from jax.experimental import pallas as pl
from jax.experimental.pallas import tpu as pltpu

TEMPERATURE = 0.2
NUM_CLASSES = 8   # background label == NUM_CLASSES (module reads self.num_classes)


def _round_up(x, m):
    return (x + m - 1) // m * m


def _supcon_proto_kernel(blkcnt_ref, stats_ref,            # SMEM scalar-prefetch refs
                         feat_ref, protos_ref, labc_ref, plabr_ref, novelr_ref,
                         out_ref,
                         *, temperature, num_classes, block_m):
    i = pl.program_id(0)

    # Default contribution (also the result for skipped all-background blocks).
    out_ref[...] = jnp.zeros_like(out_ref)

    @pl.when(blkcnt_ref[i] > 0)        # empty-tile skip from an SMEM scalar
    def _():
        inv_t = jnp.float32(1.0 / temperature)
        numel = stats_ref[0].astype(jnp.float32)     # global foreground count
        n_novel = stats_ref[1].astype(jnp.float32)   # global novel count

        row0 = pl.multiple_of(i * block_m, block_m)
        f_blk = feat_ref[pl.ds(row0, block_m), :]    # (TM, Kp) bf16, view of resident slab
        p = protos_ref[...]                          # (B,  Kp) bf16
        lab_c = labc_ref[...]                        # (TM, 1) int32 (this block's labels)
        plab_r = plabr_ref[...]                      # (1, B)  int32
        novel_r = novelr_ref[...]                    # (1, Mp) f32 mask of novel COLUMNS
        B = p.shape[0]

        # --- MXU: bf16 operands, f32 accumulation, default precision ---------
        S = jax.lax.dot_general(f_blk, feat_ref[...], (((1,), (1,)), ((), ())),
                                preferred_element_type=jnp.float32) * inv_t   # (TM, Mp)
        P = jax.lax.dot_general(f_blk, p, (((1,), (1,)), ((), ())),
                                preferred_element_type=jnp.float32) * inv_t   # (TM, B)

        # Diagonal S_ii = ||f_i||^2 / T on the VPU — replaces any (M,M) iota /
        # off-diagonal mask materialisation.
        fb32 = f_blk.astype(jnp.float32)
        diag = jnp.sum(fb32 * fb32, axis=1, keepdims=True) * inv_t            # (TM, 1)

        # Per-row (block) fg / base / novel masks (padding rows carry the
        # background label, so they are excluded everywhere).
        fg_c = lab_c != num_classes                                           # (TM, 1)
        base_any_c = jnp.sum((lab_c == plab_r).astype(jnp.float32),
                             axis=1, keepdims=True) > 0.0                     # (TM, 1)
        novel_c = jnp.logical_and(fg_c, jnp.logical_not(base_any_c)).astype(jnp.float32)
        base_c = jnp.logical_and(fg_c, base_any_c).astype(jnp.float32)

        # --- one fused exp(S) pass, masked row-reductions reused twice -------
        expS = jnp.exp(S)
        t_sum = jnp.sum(expS * novel_r, axis=1, keepdims=True)   # sum_{j novel} exp(S_ij)
        s_sum = jnp.sum(S * novel_r, axis=1, keepdims=True)      # sum_{j novel} S_ij

        # Prototype-side terms (zero-padding along K is exact for P).
        sumP = jnp.sum(P, axis=1, keepdims=True)                              # (TM, 1)
        sum_expP = jnp.sum(jnp.exp(P), axis=1, keepdims=True)                 # (TM, 1)
        k_row = jax.lax.broadcasted_iota(jnp.int32, (1, B), 1)
        own_proto = (k_row == lab_c).astype(jnp.float32)                      # (TM, B)
        bi_pi = jnp.sum(P * own_proto, axis=1, keepdims=True)                 # (TM, 1)

        # ---- novel branch (reference quirk: ni_pk summed WITHOUT exp) -------
        denom_n = t_sum - jnp.exp(diag) + sumP          # remove the j == i term
        denom_n = jnp.where(novel_c > 0.0, denom_n, 1.0)
        count = n_novel - 1.0
        count_safe = jnp.where(count > 0.0, count, 1.0)
        row_num = (s_sum - diag) - jnp.log(denom_n) * count
        loss_novel = jnp.sum(-(row_num / count_safe) * novel_c)
        loss_novel = jnp.where(n_novel > 1.0, loss_novel, 0.0)

        # ---- base branch (t_sum reused for the exp(bi_nk) part) -------------
        denom_b = t_sum + sum_expP                      # strictly positive
        base_log_prob = bi_pi - jnp.log(denom_b)
        loss_base = jnp.sum(-base_log_prob * base_c)

        numel_safe = jnp.where(numel > 0.0, numel, 1.0)   # ref would NaN + exit()
        val = (loss_novel + loss_base) / numel_safe
        # Lane-dense (8,128) partial tile; wrapper picks one element per block.
        out_ref[...] = jnp.full(out_ref.shape, val, dtype=jnp.float32)
    # TODO(synk): the reference's runtime `assert loss >= 0` / exit() guard is
    # not reproduced inside the kernel.


@functools.partial(jax.jit, static_argnames=("temperature", "num_classes", "block_m"))
def supcon_loss_with_prototype(features, labels, protos, proto_labels,
                               temperature=TEMPERATURE, num_classes=NUM_CLASSES,
                               block_m=128):
    assert features.shape[0] == labels.shape[0]
    M, K = features.shape
    B = protos.shape[0]
    Kp = _round_up(K, 128)
    Mp = _round_up(M, max(block_m, 128))
    grid_m = Mp // block_m

    # bf16 operands (half the HBM->VMEM traffic; native MXU input dtype).
    f = jnp.zeros((Mp, Kp), jnp.bfloat16).at[:M, :K].set(features.astype(jnp.bfloat16))
    p = jnp.zeros((B, Kp), jnp.bfloat16).at[:, :K].set(protos.astype(jnp.bfloat16))
    lab = jnp.full((Mp,), num_classes, jnp.int32).at[:M].set(labels.astype(jnp.int32))
    plab = proto_labels.astype(jnp.int32)

    # Grid-invariant masks / counts computed ONCE here (previously recomputed
    # every grid step inside the kernel).
    fg = lab != num_classes                                        # (Mp,)
    base_any = jnp.any(lab[None, :] == plab[:, None], axis=0)      # (Mp,)
    novel = jnp.logical_and(fg, jnp.logical_not(base_any))         # (Mp,)

    novel_r = novel.astype(jnp.float32).reshape(1, Mp)             # lane-dense column mask
    lab_c = lab.reshape(Mp, 1)
    plab_r = plab.reshape(1, B)

    blk_cnt = jnp.sum(fg.reshape(grid_m, block_m).astype(jnp.int32), axis=1)   # (grid_m,)
    stats = jnp.stack([jnp.sum(fg.astype(jnp.int32)),
                       jnp.sum(novel.astype(jnp.int32))])                      # (2,) int32

    kernel = functools.partial(_supcon_proto_kernel, temperature=temperature,
                               num_classes=num_classes, block_m=block_m)

    # Scoped-VMEM budget: resident f/p slabs (double-buffered) + the
    # (block_m, Mp) f32 S / exp(S) working set, with headroom.
    est = 2 * 2 * (Mp * Kp + B * Kp) + 8 * block_m * Mp * 4 + (2 << 20)
    vmem_bytes = int(min(max(est, 32 * 1024 * 1024), 64 * 1024 * 1024))

    partials = pl.pallas_call(
        kernel,
        out_shape=jax.ShapeDtypeStruct((grid_m * 8, 128), jnp.float32),
        grid_spec=pltpu.PrefetchScalarGridSpec(
            num_scalar_prefetch=2,
            grid=(grid_m,),
            in_specs=[
                pl.BlockSpec((Mp, Kp), lambda i, c, s: (0, 0)),       # features (resident, full)
                pl.BlockSpec((B, Kp), lambda i, c, s: (0, 0)),        # prototypes (resident)
                pl.BlockSpec((block_m, 1), lambda i, c, s: (i, 0)),   # per-block labels (column)
                pl.BlockSpec((1, B), lambda i, c, s: (0, 0)),         # proto labels (row)
                pl.BlockSpec((1, Mp), lambda i, c, s: (0, 0)),        # novel column mask
            ],
            out_specs=pl.BlockSpec((8, 128), lambda i, c, s: (i, 0)),
        ),
        compiler_params=pltpu.CompilerParams(
            dimension_semantics=("parallel",),
            vmem_limit_bytes=vmem_bytes),
    )(blk_cnt, stats, f, p, lab_c, plab_r, novel_r)

    # Each (8,128) tile holds the block's scalar partial broadcast.
    return jnp.sum(partials.reshape(grid_m, 8, 128)[:, 0, 0])


def _reference_numpy(features, labels, protos, proto_labels, temperature, num_classes):
    """Direct port of the PyTorch forward (boolean indexing) in numpy."""
    fg = labels != num_classes
    f = features[fg]
    lab = labels[fg]
    numel = f.shape[0]
    base_idx = np.any(lab[None, :] == proto_labels[:, None], axis=0)
    novel_idx = ~base_idx
    loss_novel = 0.0
    if novel_idx.sum() > 1:
        fn = f[novel_idx]
        ni_pk = fn @ protos.T / temperature
        ni_nj = fn @ fn.T / temperature
        mask = 1.0 - np.eye(fn.shape[0], dtype=np.float64)
        exp_ni_nj = np.exp(ni_nj) * mask
        log_prob = ni_nj - np.log(exp_ni_nj.sum(1, keepdims=True)
                                  + ni_pk.sum(1, keepdims=True))
        loss_novel = float((-(log_prob * mask).sum(1) / mask.sum(1)).sum())
    loss_base = 0.0
    if base_idx.any():
        fb = f[base_idx]
        lb = lab[base_idx]
        bi_pi = (fb * protos[lb]).sum(1) / temperature
        bi_nk = fb @ f[novel_idx].T / temperature
        bi_pk = fb @ protos.T / temperature
        loss_base = float(
            (-(bi_pi - np.log(np.exp(bi_nk).sum(1) + np.exp(bi_pk).sum(1)))).sum())
    return (loss_novel + loss_base) / numel


if __name__ == "__main__":
    key = jax.random.PRNGKey(0)
    M, K, B = 64, 32, 4
    k1, k2, k3 = jax.random.split(key, 3)

    feats = jax.random.normal(k1, (M, K), jnp.float32)
    feats = feats / jnp.linalg.norm(feats, axis=1, keepdims=True)
    protos = jax.random.normal(k2, (B, K), jnp.float32)
    protos = protos / jnp.linalg.norm(protos, axis=1, keepdims=True)
    # labels in [0, NUM_CLASSES]; NUM_CLASSES == background, 0..B-1 are base classes.
    labels = jax.random.randint(k3, (M,), 0, NUM_CLASSES + 1, jnp.int32)
    proto_labels = jnp.arange(B, dtype=jnp.int32)

    loss = supcon_loss_with_prototype(feats, labels, protos, proto_labels)
    loss = jax.block_until_ready(loss)

    ref = _reference_numpy(np.asarray(feats, np.float64), np.asarray(labels),
                           np.asarray(protos, np.float64), np.asarray(proto_labels),
                           TEMPERATURE, NUM_CLASSES)
    assert np.isfinite(float(loss)), float(loss)
    assert abs(float(loss) - ref) <= 2e-2 * max(1.0, abs(ref)), (float(loss), ref)
    print("KERNEL_OK")
</pallas_src>

<mosaic_0001>
module attributes {stable_mosaic.version = 11 : i64} {
  func.func @_supcon_proto_kernel(%arg0: i32, %arg1: memref<1xi32, #tpu.memory_space<smem>>, %arg2: memref<2xi32, #tpu.memory_space<smem>>, %arg3: memref<128x128xbf16, #tpu.memory_space<vmem>>, %arg4: memref<4x128xbf16, #tpu.memory_space<vmem>>, %arg5: memref<128x1xi32, #tpu.memory_space<vmem>>, %arg6: memref<1x4xi32, #tpu.memory_space<vmem>>, %arg7: memref<1x128xf32, #tpu.memory_space<vmem>>, %arg8: memref<8x128xf32, #tpu.memory_space<vmem>>) attributes {dimension_semantics = [#tpu.dimension_semantics<parallel>], iteration_bounds = array<i64: 1>, scalar_prefetch = 2 : i64, scratch_operands = 0 : i64, tpu.core_type = #tpu.core_type<tc>, window_params = [{pipeline_mode = #tpu.pipeline_mode<synchronous>, transform_indices = @transform_0, window_bounds = array<i64: 128, 128>}, {pipeline_mode = #tpu.pipeline_mode<synchronous>, transform_indices = @transform_1, window_bounds = array<i64: 4, 128>}, {transform_indices = @transform_2, window_bounds = array<i64: 128, 1>}, {pipeline_mode = #tpu.pipeline_mode<synchronous>, transform_indices = @transform_3, window_bounds = array<i64: 1, 4>}, {pipeline_mode = #tpu.pipeline_mode<synchronous>, transform_indices = @transform_4, window_bounds = array<i64: 1, 128>}, {transform_indices = @transform_5, window_bounds = array<i64: 8, 128>}]} {
    %cst = arith.constant 0.000000e+00 : f32
    %0 = vector.broadcast %cst : f32 to vector<8x128xf32>
    %c0 = arith.constant 0 : index
    %c0_0 = arith.constant 0 : index
    %1 = vector.load %arg8[%c0, %c0_0] : memref<8x128xf32, #tpu.memory_space<vmem>>, vector<8x128xf32>
    tpu.vector_store %arg8[%c0, %c0_0], %0 {strides = array<i32>} : memref<8x128xf32, #tpu.memory_space<vmem>>, vector<8x128xf32>,
    %2 = arith.index_cast %arg0 : i32 to index
    %3 = memref.load %arg1[%2] : memref<1xi32, #tpu.memory_space<smem>>
    %c0_i32 = arith.constant 0 : i32
    %4 = arith.cmpi sgt, %3, %c0_i32 : i32
    %5 = arith.extui %4 : i1 to i32
    %c0_i32_1 = arith.constant 0 : i32
    %6 = arith.cmpi ne, %5, %c0_i32_1 : i32
    scf.if %6 {
      %c0_2 = arith.constant 0 : index
      %7 = memref.load %arg2[%c0_2] : memref<2xi32, #tpu.memory_space<smem>>
      %8 = arith.sitofp %7 : i32 to f32
      %c1 = arith.constant 1 : index
      %9 = memref.load %arg2[%c1] : memref<2xi32, #tpu.memory_space<smem>>
      %10 = arith.sitofp %9 : i32 to f32
      %c128_i32 = arith.constant 128 : i32
      %11 = arith.muli %arg0, %c128_i32 : i32
      %12 = tpu.assume_multiple %11, 128 : i32
      %13 = arith.index_cast %12 : i32 to index
      %c0_3 = arith.constant 0 : index
      %14 = vector.load %arg3[%13, %c0_3] : memref<128x128xbf16, #tpu.memory_space<vmem>>, vector<128x128xbf16>
      %c0_4 = arith.constant 0 : index
      %c0_5 = arith.constant 0 : index
      %15 = vector.load %arg4[%c0_4, %c0_5] : memref<4x128xbf16, #tpu.memory_space<vmem>>, vector<4x128xbf16>
      %c0_6 = arith.constant 0 : index
      %c0_7 = arith.constant 0 : index
      %16 = vector.load %arg5[%c0_6, %c0_7] : memref<128x1xi32, #tpu.memory_space<vmem>>, vector<128x1xi32>
      %c0_8 = arith.constant 0 : index
      %c0_9 = arith.constant 0 : index
      %17 = vector.load %arg6[%c0_8, %c0_9] : memref<1x4xi32, #tpu.memory_space<vmem>>, vector<1x4xi32>
      %c0_10 = arith.constant 0 : index
      %c0_11 = arith.constant 0 : index
      %18 = vector.load %arg7[%c0_10, %c0_11] : memref<1x128xf32, #tpu.memory_space<vmem>>, vector<1x128xf32>
      %c0_12 = arith.constant 0 : index
      %c0_13 = arith.constant 0 : index
      %19 = vector.load %arg3[%c0_12, %c0_13] : memref<128x128xbf16, #tpu.memory_space<vmem>>, vector<128x128xbf16>
      %cst_14 = arith.constant dense<0.000000e+00> : vector<128x128xf32>
      %20 = tpu.matmul %14, %19, %cst_14 {dimension_numbers = #tpu.dot_dimension_numbers<[1], [1], [0], [0], [0, 0, 1, 0], [], []>} : vector<128x128xbf16>, vector<128x128xbf16>, vector<128x128xf32> -> vector<128x128xf32>
      %cst_15 = arith.constant 5.000000e+00 : f32
      %21 = vector.broadcast %cst_15 : f32 to vector<128x128xf32>
      %22 = arith.mulf %20, %21 : vector<128x128xf32>
      %cst_16 = arith.constant dense<0.000000e+00> : vector<128x4xf32>
      %23 = tpu.matmul %14, %15, %cst_16 {dimension_numbers = #tpu.dot_dimension_numbers<[1], [1], [0], [0], [0, 0, 1, 0], [], []>} : vector<128x128xbf16>, vector<4x128xbf16>, vector<128x4xf32> -> vector<128x4xf32>
      %cst_17 = arith.constant 5.000000e+00 : f32
      %24 = vector.broadcast %cst_17 : f32 to vector<128x4xf32>
      %25 = arith.mulf %23, %24 : vector<128x4xf32>
      %26 = arith.extf %14 : vector<128x128xbf16> to vector<128x128xf32>
      %27 = arith.mulf %26, %26 : vector<128x128xf32>
      %cst_18 = arith.constant dense<0.000000e+00> : vector<128xf32>
      %28 = vector.multi_reduction <add>, %27, %cst_18 [1] : vector<128x128xf32> to vector<128xf32>
      %29 = vector.shape_cast %28 : vector<128xf32> to vector<128x1xf32>
      %cst_19 = arith.constant 5.000000e+00 : f32
      %30 = vector.broadcast %cst_19 : f32 to vector<128x1xf32>
      %31 = arith.mulf %29, %30 : vector<128x1xf32>
      %c8_i32 = arith.constant 8 : i32
      %32 = vector.broadcast %c8_i32 : i32 to vector<128x1xi32>
      %33 = arith.cmpi ne, %16, %32 : vector<128x1xi32>
      %34 = vector.broadcast %16 : vector<128x1xi32> to vector<128x4xi32>
      %35 = vector.broadcast %17 : vector<1x4xi32> to vector<128x4xi32>
      %36 = arith.cmpi eq, %34, %35 : vector<128x4xi32>
      %37 = arith.extui %36 : vector<128x4xi1> to vector<128x4xi32>
      %38 = arith.sitofp %37 : vector<128x4xi32> to vector<128x4xf32>
      %cst_20 = arith.constant dense<0.000000e+00> : vector<128xf32>
      %39 = vector.multi_reduction <add>, %38, %cst_20 [1] : vector<128x4xf32> to vector<128xf32>
      %40 = vector.shape_cast %39 : vector<128xf32> to vector<128x1xf32>
      %cst_21 = arith.constant 0.000000e+00 : f32
      %41 = vector.broadcast %cst_21 : f32 to vector<128x1xf32>
      %42 = arith.cmpf ogt, %40, %41 : vector<128x1xf32>
      %cst_22 = arith.constant dense<true> : vector<128x1xi1>
      %43 = arith.xori %42, %cst_22 : vector<128x1xi1>
      %44 = arith.andi %33, %43 : vector<128x1xi1>
      %45 = arith.extui %44 : vector<128x1xi1> to vector<128x1xi32>
      %46 = arith.sitofp %45 : vector<128x1xi32> to vector<128x1xf32>
      %47 = arith.andi %33, %42 : vector<128x1xi1>
      %48 = arith.extui %47 : vector<128x1xi1> to vector<128x1xi32>
      %49 = arith.sitofp %48 : vector<128x1xi32> to vector<128x1xf32>
      %50 = math.exp %22 : vector<128x128xf32>
      %51 = vector.broadcast %18 : vector<1x128xf32> to vector<128x128xf32>
      %52 = arith.mulf %50, %51 : vector<128x128xf32>
      %cst_23 = arith.constant dense<0.000000e+00> : vector<128xf32>
      %53 = vector.multi_reduction <add>, %52, %cst_23 [1] : vector<128x128xf32> to vector<128xf32>
      %54 = vector.shape_cast %53 : vector<128xf32> to vector<128x1xf32>
      %55 = vector.broadcast %18 : vector<1x128xf32> to vector<128x128xf32>
      %56 = arith.mulf %22, %55 : vector<128x128xf32>
      %cst_24 = arith.constant dense<0.000000e+00> : vector<128xf32>
      %57 = vector.multi_reduction <add>, %56, %cst_24 [1] : vector<128x128xf32> to vector<128xf32>
      %58 = vector.shape_cast %57 : vector<128xf32> to vector<128x1xf32>
      %cst_25 = arith.constant dense<0.000000e+00> : vector<128xf32>
      %59 = vector.multi_reduction <add>, %25, %cst_25 [1] : vector<128x4xf32> to vector<128xf32>
      %60 = vector.shape_cast %59 : vector<128xf32> to vector<128x1xf32>
      %61 = math.exp %25 : vector<128x4xf32>
      %cst_26 = arith.constant dense<0.000000e+00> : vector<128xf32>
      %62 = vector.multi_reduction <add>, %61, %cst_26 [1] : vector<128x4xf32> to vector<128xf32>
      %63 = vector.shape_cast %62 : vector<128xf32> to vector<128x1xf32>
      %64 = tpu.iota {dimensions = array<i32: 1>} : vector<1x4xi32>
      %65 = vector.broadcast %64 : vector<1x4xi32> to vector<128x4xi32>
      %66 = vector.broadcast %16 : vector<128x1xi32> to vector<128x4xi32>
      %67 = arith.cmpi eq, %65, %66 : vector<128x4xi32>
      %68 = arith.extui %67 : vector<128x4xi1> to vector<128x4xi32>
      %69 = arith.sitofp %68 : vector<128x4xi32> to vector<128x4xf32>
      %70 = arith.mulf %25, %69 : vector<128x4xf32>
      %cst_27 = arith.constant dense<0.000000e+00> : vector<128xf32>
      %71 = vector.multi_reduction <add>, %70, %cst_27 [1] : vector<128x4xf32> to vector<128xf32>
      %72 = vector.shape_cast %71 : vector<128xf32> to vector<128x1xf32>
      %73 = math.exp %31 : vector<128x1xf32>
      %74 = arith.subf %54, %73 : vector<128x1xf32>
      %75 = arith.addf %74, %60 : vector<128x1xf32>
      %cst_28 = arith.constant 0.000000e+00 : f32
      %76 = vector.broadcast %cst_28 : f32 to vector<128x1xf32>
      %77 = arith.cmpf ogt, %46, %76 : vector<128x1xf32>
      %cst_29 = arith.constant 1.000000e+00 : f32
      %78 = vector.broadcast %cst_29 : f32 to vector<128x1xf32>
      %79 = arith.select %77, %75, %78 : vector<128x1xi1>, vector<128x1xf32>
      %cst_30 = arith.constant 1.000000e+00 : f32
      %80 = arith.subf %10, %cst_30 : f32
      %cst_31 = arith.constant 0.000000e+00 : f32
      %81 = arith.cmpf ogt, %80, %cst_31 : f32
      %cst_32 = arith.constant 1.000000e+00 : f32
      %82 = arith.select %81, %80, %cst_32 : f32
      %83 = arith.subf %58, %31 : vector<128x1xf32>
      %84 = math.log %79 : vector<128x1xf32>
      %85 = vector.broadcast %80 : f32 to vector<128x1xf32>
      %86 = arith.mulf %84, %85 : vector<128x1xf32>
      %87 = arith.subf %83, %86 : vector<128x1xf32>
      %88 = vector.broadcast %82 : f32 to vector<128x1xf32>
      %89 = arith.divf %87, %88 : vector<128x1xf32>
      %cst_33 = arith.constant 0.000000e+00 : f32
      %90 = vector.broadcast %cst_33 : f32 to vector<128x1xf32>
      %91 = arith.subf %90, %89 : vector<128x1xf32>
      %92 = arith.mulf %91, %46 : vector<128x1xf32>
      %93 = vector.shape_cast %92 : vector<128x1xf32> to vector<1x128x1xf32>
      %cst_34 = arith.constant dense<0.000000e+00> : vector<1xf32>
      %94 = vector.multi_reduction <add>, %93, %cst_34 [1, 2] : vector<1x128x1xf32> to vector<1xf32>
      %95 = vector.shape_cast %94 : vector<1xf32> to vector<1x1x1xf32>
      %96 = vector.extract %95[0, 0, 0] : f32 from vector<1x1x1xf32>
      %cst_35 = arith.constant 1.000000e+00 : f32
      %97 = arith.cmpf ogt, %10, %cst_35 : f32
      %cst_36 = arith.constant 0.000000e+00 : f32
      %98 = arith.select %97, %96, %cst_36 : f32
      %99 = arith.addf %54, %63 : vector<128x1xf32>
      %100 = math.log %99 : vector<128x1xf32>
      %101 = arith.subf %72, %100 : vector<128x1xf32>
      %cst_37 = arith.constant 0.000000e+00 : f32
      %102 = vector.broadcast %cst_37 : f32 to vector<128x1xf32>
      %103 = arith.subf %102, %101 : vector<128x1xf32>
      %104 = arith.mulf %103, %49 : vector<128x1xf32>
      %105 = vector.shape_cast %104 : vector<128x1xf32> to vector<1x128x1xf32>
      %cst_38 = arith.constant dense<0.000000e+00> : vector<1xf32>
      %106 = vector.multi_reduction <add>, %105, %cst_38 [1, 2] : vector<1x128x1xf32> to vector<1xf32>
      %107 = vector.shape_cast %106 : vector<1xf32> to vector<1x1x1xf32>
      %108 = vector.extract %107[0, 0, 0] : f32 from vector<1x1x1xf32>
      %cst_39 = arith.constant 0.000000e+00 : f32
      %109 = arith.cmpf ogt, %8, %cst_39 : f32
      %cst_40 = arith.constant 1.000000e+00 : f32
      %110 = arith.select %109, %8, %cst_40 : f32
      %111 = arith.addf %98, %108 : f32
      %112 = arith.divf %111, %110 : f32
      %113 = vector.broadcast %112 : f32 to vector<8x128xf32>
      %c0_41 = arith.constant 0 : index
      %c0_42 = arith.constant 0 : index
      %114 = vector.load %arg8[%c0_41, %c0_42] : memref<8x128xf32, #tpu.memory_space<vmem>>, vector<8x128xf32>
      tpu.vector_store %arg8[%c0_41, %c0_42], %113 {strides = array<i32>} : memref<8x128xf32, #tpu.memory_space<vmem>>, vector<8x128xf32>,
    } else {
    }
    return
  }
  func.func @transform_0(%arg0: i32, %arg1: memref<1xi32, #tpu.memory_space<smem>>, %arg2: memref<2xi32, #tpu.memory_space<smem>>) -> (i32, i32) {
    %c0_i32 = arith.constant 0 : i32
    %c0_i32_0 = arith.constant 0 : i32
    %c0_i32_1 = arith.constant 0 : i32
    return %c0_i32, %c0_i32_0 : i32, i32
  }
  func.func @transform_1(%arg0: i32, %arg1: memref<1xi32, #tpu.memory_space<smem>>, %arg2: memref<2xi32, #tpu.memory_space<smem>>) -> (i32, i32) {
    %c0_i32 = arith.constant 0 : i32
    %c0_i32_0 = arith.constant 0 : i32
    %c0_i32_1 = arith.constant 0 : i32
    return %c0_i32, %c0_i32_0 : i32, i32
  }
  func.func @transform_2(%arg0: i32, %arg1: memref<1xi32, #tpu.memory_space<smem>>, %arg2: memref<2xi32, #tpu.memory_space<smem>>) -> (i32, i32) {
    %c0_i32 = arith.constant 0 : i32
    %c0_i32_0 = arith.constant 0 : i32
    return %arg0, %c0_i32 : i32, i32
  }
  func.func @transform_3(%arg0: i32, %arg1: memref<1xi32, #tpu.memory_space<smem>>, %arg2: memref<2xi32, #tpu.memory_space<smem>>) -> (i32, i32) {
    %c0_i32 = arith.constant 0 : i32
    %c0_i32_0 = arith.constant 0 : i32
    %c0_i32_1 = arith.constant 0 : i32
    return %c0_i32, %c0_i32_0 : i32, i32
  }
  func.func @transform_4(%arg0: i32, %arg1: memref<1xi32, #tpu.memory_space<smem>>, %arg2: memref<2xi32, #tpu.memory_space<smem>>) -> (i32, i32) {
    %c0_i32 = arith.constant 0 : i32
    %c0_i32_0 = arith.constant 0 : i32
    %c0_i32_1 = arith.constant 0 : i32
    return %c0_i32, %c0_i32_0 : i32, i32
  }
  func.func @transform_5(%arg0: i32, %arg1: memref<1xi32, #tpu.memory_space<smem>>, %arg2: memref<2xi32, #tpu.memory_space<smem>>) -> (i32, i32) {
    %c0_i32 = arith.constant 0 : i32
    %c0_i32_0 = arith.constant 0 : i32
    return %arg0, %c0_i32 : i32, i32
  }
}

</mosaic_0001>

<llo_original>
// kernel: supcon_loss_with_prototype.1
$region0: #{supcon_loss_with_prototype.1}
  #allocation0 [shape = 'u32[]', space=smem, size = 0x4, offset = 0x4, fixed_abs, tag = 'smem constant byte address 0x4 - core index']
  #allocation1 [shape = 'u32[144,128]{1,0:T(1,128)}', space=vmem, size = 0x12000, scoped, tag = 'internal scratch']
  #allocation2 [shape = 's32[1]{0}', space=sflag, size = 0x4, scoped, tag = 'scoped memory for supcon_loss_with_prototype.1']
  #allocation3 [shape = 's32[1]{0:T(128)S(6)}', space=smem, size = 0x200, scoped, tag = 'prefetched SMEM operand 0']
  #allocation4 [shape = 'u8[512]{0}', space=smem, size = 0x200, scoped, tag = 'prefetched SMEM operand 1']
  %s0 = inlined_call_operand.<no memory space> [shape: s32[1], index: 0, kind: input, shape index: {}]
  %s1 = inlined_call_operand.vmem [shape: s32[2], index: 1, kind: input, shape index: {}]
  %s2 = inlined_call_operand.vmem [shape: bf16[128,128], index: 2, kind: input, shape index: {}]
  %s3 = inlined_call_operand.vmem [shape: bf16[4,128], index: 3, kind: input, shape index: {}]
  %s4 = inlined_call_operand.vmem [shape: s32[128,1], index: 4, kind: input, shape index: {}]
  %s5 = inlined_call_operand.vmem [shape: s32[1,4], index: 5, kind: input, shape index: {}]
  %s6 = inlined_call_operand.vmem [shape: f32[1,128], index: 6, kind: input, shape index: {}]
  %s7 = inlined_call_operand.vmem [shape: f32[8,128], index: 7, kind: output, shape index: {}]
  %s8 = sld [smem:[#allocation0]]
  $region34: #{supcon_loss_with_prototype.1} parent=0
    _
  %s10 = ssub.s32 1, %s8
  %s11 = scalar_select 0, %s10, %s8
  %12 = sst [smem:[#allocation3]] %s0
  %s13 = sshll.u32 %s1, 4
  %s14 = int_to_ptr.vmem [resolvable:$true] %s13
  %16 = dma.vmem_to_smem %s14, 16, [#allocation4], [#allocation2]
  %17 = dma.done [#allocation2], 16
  %18 = sfence
  // Predicated region
  $region2: #{supcon_loss_with_prototype.1} parent=0 // pred_check
    _
  $region3: #{supcon_loss_with_prototype.1} parent=0 // pred_check_branch
    %20 = sbr.rel (0) target = $region5
  $region4: #{supcon_loss_with_prototype.1} parent=0 // pred_region
    _
  $region5: #{supcon_loss_with_prototype.1} parent=0 // pred_fallthru
    _
  // Predicated region
  $region6: #{supcon_loss_with_prototype.1} parent=0 // pred_check
    _
  $region7: #{supcon_loss_with_prototype.1} parent=0 // pred_check_branch
    %22 = sbr.rel (0) target = $region9
  $region8: #{supcon_loss_with_prototype.1} parent=0 // pred_region
    _
  $region9: #{supcon_loss_with_prototype.1} parent=0 // pred_fallthru
    _
  // Predicated region
  $region10: #{supcon_loss_with_prototype.1} parent=0 // pred_check
    _
  $region11: #{supcon_loss_with_prototype.1} parent=0 // pred_check_branch
    %24 = sbr.rel (0) target = $region13
  $region12: #{supcon_loss_with_prototype.1} parent=0 // pred_region
    _
  $region13: #{supcon_loss_with_prototype.1} parent=0 // pred_fallthru
    _
  // Predicated region
  $region14: #{supcon_loss_with_prototype.1} parent=0 // pred_check
    _
  $region15: #{supcon_loss_with_prototype.1} parent=0 // pred_check_branch
    %26 = sbr.rel (0) target = $region17
  $region16: #{supcon_loss_with_prototype.1} parent=0 // pred_region
    _
  $region17: #{supcon_loss_with_prototype.1} parent=0 // pred_fallthru
    _
  // Predicated region
  $region18: #{supcon_loss_with_prototype.1} parent=0 // pred_check
    _
  $region19: #{supcon_loss_with_prototype.1} parent=0 // pred_check_branch
    %28 = sbr.rel (0) target = $region21
  $region20: #{supcon_loss_with_prototype.1} parent=0 // pred_region
    _
  $region21: #{supcon_loss_with_prototype.1} parent=0 // pred_fallthru
    _
  %30 = vst [vmem:[%s7] sm:$0xff] 0.0
  %s31 = sld [smem:[#allocation3]]
  %p32 = scmp.gt.s32.totalorder %s31, 0
  // Predicated region
  $region22: #{supcon_loss_with_prototype.1} parent=0 // pred_check
    %p33 = pneg %p32
  $region23: #{supcon_loss_with_prototype.1} parent=0 // pred_check_branch
    %35 = sbr.rel (%p33) target = $region25
  $region24: #{supcon_loss_with_prototype.1} parent=0 // pred_region
    %s36 = sld [smem:[#allocation4]]
    %s37 = scvt.s32.f32 %s36
    %s38 = sld [smem:[#allocation4 + $0x1]]
    %s39 = scvt.s32.f32 %s38
    %s40 = smul.u32 0, 128
    %s41 = sshra.s32 %s40, 3
    %s42 = sand.u32 %s40, 7
    %s43 = smul.addr %s41, 4
    %s44 = scalar_lea.vmem %s2, %s43
    %v45 = vld [vmem:[%s44] sm:$0xf]
    %v46 = vld [vmem:[%s44 + $0x4] sm:$0xf]
    %v47 = vld [vmem:[%s44 + $0x8] sm:$0xf]
    %v48 = vld [vmem:[%s44 + $0xc] sm:$0xf]
    %v49 = vld [vmem:[%s44 + $0x10] sm:$0xf]
    %v50 = vld [vmem:[%s44 + $0x14] sm:$0xf]
    %v51 = vld [vmem:[%s44 + $0x18] sm:$0xf]
    %v52 = vld [vmem:[%s44 + $0x1c] sm:$0xf]
    %v53 = vld [vmem:[%s44 + $0x20] sm:$0xf]
    %v54 = vld [vmem:[%s44 + $0x24] sm:$0xf]
    %v55 = vld [vmem:[%s44 + $0x28] sm:$0xf]
    %v56 = vld [vmem:[%s44 + $0x2c] sm:$0xf]
    %v57 = vld [vmem:[%s44 + $0x30] sm:$0xf]
    %v58 = vld [vmem:[%s44 + $0x34] sm:$0xf]
    %v59 = vld [vmem:[%s44 + $0x38] sm:$0xf]
    %v60 = vld [vmem:[%s44 + $0x3c] sm:$0xf]
    %v61 = vld [vmem:[%s3] sm:$0x3]
    %v62 = vld [vmem:[%s4] sm:$0xff]
    %v63 = vld [vmem:[%s4 + $0x8] sm:$0xff]
    %v64 = vld [vmem:[%s4 + $0x10] sm:$0xff]
    %v65 = vld [vmem:[%s4 + $0x18] sm:$0xff]
    %v66 = vld [vmem:[%s4 + $0x20] sm:$0xff]
    %v67 = vld [vmem:[%s4 + $0x28] sm:$0xff]
    %v68 = vld [vmem:[%s4 + $0x30] sm:$0xff]
    %v69 = vld [vmem:[%s4 + $0x38] sm:$0xff]
    %v70 = vld [vmem:[%s4 + $0x40] sm:$0xff]
    %v71 = vld [vmem:[%s4 + $0x48] sm:$0xff]
    %v72 = vld [vmem:[%s4 + $0x50] sm:$0xff]
    %v73 = vld [vmem:[%s4 + $0x58] sm:$0xff]
    %v74 = vld [vmem:[%s4 + $0x60] sm:$0xff]
    %v75 = vld [vmem:[%s4 + $0x68] sm:$0xff]
    %v76 = vld [vmem:[%s4 + $0x70] sm:$0xff]
    %v77 = vld [vmem:[%s4 + $0x78] sm:$0xff]
    %v78 = vld [vmem:[%s5] sm:$0x1]
    %v79 = vld [vmem:[%s6] sm:$0x1]
    %v80 = vld [vmem:[%s2] sm:$0xf]
    %v81 = vld [vmem:[%s2 + $0x4] sm:$0xf]
    %v82 = vld [vmem:[%s2 + $0x8] sm:$0xf]
    %v83 = vld [vmem:[%s2 + $0xc] sm:$0xf]
    %v84 = vld [vmem:[%s2 + $0x10] sm:$0xf]
    %v85 = vld [vmem:[%s2 + $0x14] sm:$0xf]
    %v86 = vld [vmem:[%s2 + $0x18] sm:$0xf]
    %v87 = vld [vmem:[%s2 + $0x1c] sm:$0xf]
    %v88 = vld [vmem:[%s2 + $0x20] sm:$0xf]
    %v89 = vld [vmem:[%s2 + $0x24] sm:$0xf]
    %v90 = vld [vmem:[%s2 + $0x28] sm:$0xf]
    %v91 = vld [vmem:[%s2 + $0x2c] sm:$0xf]
    %v92 = vld [vmem:[%s2 + $0x30] sm:$0xf]
    %v93 = vld [vmem:[%s2 + $0x34] sm:$0xf]
    %v94 = vld [vmem:[%s2 + $0x38] sm:$0xf]
    %v95 = vld [vmem:[%s2 + $0x3c] sm:$0xf]
    %v112 = vunpack.c.l.b16 %v45
    %v113 = vunpack.c.l.b16 %v46
    %v114 = vunpack.c.l.b16 %v47
    %v115 = vunpack.c.l.b16 %v48
    %v116 = vunpack.c.l.b16 %v49
    %v117 = vunpack.c.l.b16 %v50
    %v118 = vunpack.c.l.b16 %v51
    %v119 = vunpack.c.l.b16 %v52
    %v120 = vunpack.c.l.b16 %v53
    %v121 = vunpack.c.l.b16 %v54
    %v122 = vunpack.c.l.b16 %v55
    %v123 = vunpack.c.l.b16 %v56
    %v124 = vunpack.c.l.b16 %v57
    %v125 = vunpack.c.l.b16 %v58
    %v126 = vunpack.c.l.b16 %v59
    %v127 = vunpack.c.l.b16 %v60
    %v128 = vpack.c.b16 %v113, %v112
    %v129 = vpack.c.b16 %v115, %v114
    %v130 = vpack.c.b16 %v117, %v116
    %v131 = vpack.c.b16 %v119, %v118
    %v132 = vpack.c.b16 %v121, %v120
    %v133 = vpack.c.b16 %v123, %v122
    %v134 = vpack.c.b16 %v125, %v124
    %v135 = vpack.c.b16 %v127, %v126
    %v160 = vunpack.c.l.b16 %v80
    %v161 = vunpack.c.l.b16 %v81
    %v162 = vunpack.c.l.b16 %v82
    %v163 = vunpack.c.l.b16 %v83
    %v164 = vunpack.c.l.b16 %v84
    %v165 = vunpack.c.l.b16 %v85
    %v166 = vunpack.c.l.b16 %v86
    %v167 = vunpack.c.l.b16 %v87
    %v168 = vunpack.c.l.b16 %v88
    %v169 = vunpack.c.l.b16 %v89
    %v170 = vunpack.c.l.b16 %v90
    %v171 = vunpack.c.l.b16 %v91
    %v172 = vunpack.c.l.b16 %v92
    %v173 = vunpack.c.l.b16 %v93
    %v174 = vunpack.c.l.b16 %v94
    %v175 = vunpack.c.l.b16 %v95
    %v176 = vpack.c.b16 %v161, %v160
    %v177 = vpack.c.b16 %v163, %v162
    %v178 = vpack.c.b16 %v165, %v164
    %v179 = vpack.c.b16 %v167, %v166
    %v180 = vpack.c.b16 %v169, %v168
    %v181 = vpack.c.b16 %v171, %v170
    %v182 = vpack.c.b16 %v173, %v172
    %v183 = vpack.c.b16 %v175, %v174
    %192 = vmatprep.subr.bf16.mxu0 0
    %193 = vmatpush1.bf16.xpose.msra.mxu0 %v183
    %194 = vmatprep.subr.bf16.mxu0 0
    %195 = vmatpush1.bf16.xpose.msra.mxu0 %v182
    %196 = vmatprep.subr.bf16.mxu0 0
    %197 = vmatpush1.bf16.xpose.msra.mxu0 %v181
    %198 = vmatprep.subr.bf16.mxu0 0
    %199 = vmatpush1.bf16.xpose.msra.mxu0 %v180
    %200 = vmatprep.subr.bf16.mxu0 0
    %201 = vmatpush1.bf16.xpose.msra.mxu0 %v179
    %202 = vmatprep.subr.bf16.mxu0 0
    %203 = vmatpush1.bf16.xpose.msra.mxu0 %v178
    %204 = vmatprep.subr.bf16.mxu0 0
    %205 = vmatpush1.bf16.xpose.msra.mxu0 %v177
    %206 = vmatprep.subr.bf16.mxu0 0
    %207 = vmatpush1.bf16.xpose.msra.mxu0 %v176
    %208 = vmatprep.subr.bf16.mxu0 0
    %209 = vmatpush2.bf16.xpose.msra.mxu0 0
    %210 = vmatprep.subr.bf16.mxu0 0
    %211 = vmatpush2.bf16.xpose.msra.mxu0 0
    %212 = vmatprep.subr.bf16.mxu0 0
    %213 = vmatpush2.bf16.xpose.msra.mxu0 0
    %214 = vmatprep.subr.bf16.mxu0 0
    %215 = vmatpush2.bf16.xpose.msra.mxu0 0
    %216 = vmatprep.subr.bf16.mxu0 0
    %217 = vmatpush2.bf16.xpose.msra.mxu0 0
    %218 = vmatprep.subr.bf16.mxu0 0
    %219 = vmatpush2.bf16.xpose.msra.mxu0 0
    %220 = vmatprep.subr.bf16.mxu0 0
    %221 = vmatpush2.bf16.xpose.msra.mxu0 0
    %222 = vmatprep.subr.bf16.mxu0 0
    %223 = vmatpush2.bf16.xpose.msra.mxu0 0
    %224 = vmatprep.mubr.bf16.mxu0 0
    %225 = vmatmul.mubr.bf16.gmra.mxu0 %v128
    %v226 = vpop.f32.mrf.mxu0
    %v227 = vadd.f32 0.0, %v226
    %v228 = vpop.f32.mrf.mxu0
    %v229 = vpop.f32.mrf.mxu0
    %v230 = vadd.f32 0.0, %v229
    %v231 = vpop.f32.mrf.mxu0
    %232 = vmatprep.mubr.bf16.mxu0 0
    %233 = vmatmul.mubr.bf16.gmra.mxu0 %v129
    %v234 = vpop.f32.mrf.mxu0
    %v235 = vadd.f32 0.0, %v234
    %v236 = vpop.f32.mrf.mxu0
    %v237 = vpop.f32.mrf.mxu0
    %v238 = vadd.f32 0.0, %v237
    %v239 = vpop.f32.mrf.mxu0
    %240 = vmatprep.mubr.bf16.mxu0 0
    %241 = vmatmul.mubr.bf16.gmra.mxu0 %v130
    %v242 = vpop.f32.mrf.mxu0
    %v243 = vadd.f32 0.0, %v242
    %v244 = vpop.f32.mrf.mxu0
    %v245 = vpop.f32.mrf.mxu0
    %v246 = vadd.f32 0.0, %v245
    %v247 = vpop.f32.mrf.mxu0
    %248 = vmatprep.mubr.bf16.mxu0 0
    %249 = vmatmul.mubr.bf16.gmra.mxu0 %v131
    %v250 = vpop.f32.mrf.mxu0
    %v251 = vadd.f32 0.0, %v250
    %v252 = vpop.f32.mrf.mxu0
    %v253 = vpop.f32.mrf.mxu0
    %v254 = vadd.f32 0.0, %v253
    %v255 = vpop.f32.mrf.mxu0
    %256 = vmatprep.mubr.bf16.mxu0 0
    %257 = vmatmul.mubr.bf16.gmra.mxu0 %v132
    %v258 = vpop.f32.mrf.mxu0
    %v259 = vadd.f32 0.0, %v258
    %v260 = vpop.f32.mrf.mxu0
    %v261 = vpop.f32.mrf.mxu0
    %v262 = vadd.f32 0.0, %v261
    %v263 = vpop.f32.mrf.mxu0
    %264 = vmatprep.mubr.bf16.mxu0 0
    %265 = vmatmul.mubr.bf16.gmra.mxu0 %v133
    %v266 = vpop.f32.mrf.mxu0
    %v267 = vadd.f32 0.0, %v266
    %v268 = vpop.f32.mrf.mxu0
    %v269 = vpop.f32.mrf.mxu0
    %v270 = vadd.f32 0.0, %v269
    %v271 = vpop.f32.mrf.mxu0
    %272 = vmatprep.mubr.bf16.mxu0 0
    %273 = vmatmul.mubr.bf16.gmra.mxu0 %v134
    %v274 = vpop.f32.mrf.mxu0
    %v275 = vadd.f32 0.0, %v274
    %v276 = vpop.f32.mrf.mxu0
    %v277 = vpop.f32.mrf.mxu0
    %v278 = vadd.f32 0.0, %v277
    %v279 = vpop.f32.mrf.mxu0
    %280 = vmatprep.mubr.bf16.mxu0 0
    %281 = vmatmul.mubr.bf16.gmra.mxu0 %v135
    %v282 = vpop.f32.mrf.mxu0
    %v283 = vadd.f32 0.0, %v282
    %v284 = vpop.f32.mrf.mxu0
    %v285 = vpop.f32.mrf.mxu0
    %v286 = vadd.f32 0.0, %v285
    %v287 = vpop.f32.mrf.mxu0
    %288 = vdwg.mxu0
    %v289 = vmul.f32 %v227, 5.0
    %v290 = vmul.f32 %v230, 5.0
    %v291 = vmul.f32 %v235, 5.0
    %v292 = vmul.f32 %v238, 5.0
    %v293 = vmul.f32 %v243, 5.0
    %v294 = vmul.f32 %v246, 5.0
    %v295 = vmul.f32 %v251, 5.0
    %v296 = vmul.f32 %v254, 5.0
    %v297 = vmul.f32 %v259, 5.0
    %v298 = vmul.f32 %v262, 5.0
    %v299 = vmul.f32 %v267, 5.0
    %v300 = vmul.f32 %v270, 5.0
    %v301 = vmul.f32 %v275, 5.0
    %v302 = vmul.f32 %v278, 5.0
    %v303 = vmul.f32 %v283, 5.0
    %v304 = vmul.f32 %v286, 5.0
    %305 = vmatprep.subr.bf16.mxu0 0
    %306 = vmatpush1.bf16.xpose.msra.mxu0 0
    %307 = vmatprep.subr.bf16.mxu0 0
    %308 = vmatpush1.bf16.xpose.msra.mxu0 0
    %309 = vmatprep.subr.bf16.mxu0 0
    %310 = vmatpush1.bf16.xpose.msra.mxu0 0
    %311 = vmatprep.subr.bf16.mxu0 0
    %312 = vmatpush1.bf16.xpose.msra.mxu0 0
    %313 = vmatprep.subr.bf16.mxu0 0
    %314 = vmatpush1.bf16.xpose.msra.mxu0 0
    %315 = vmatprep.subr.bf16.mxu0 0
    %316 = vmatpush1.bf16.xpose.msra.mxu0 0
    %317 = vmatprep.subr.bf16.mxu0 0
    %318 = vmatpush1.bf16.xpose.msra.mxu0 0
    %319 = vmatprep.subr.bf16.mxu0 0
    %320 = vmatpush1.bf16.xpose.msra.mxu0 %v61
    %321 = vmatprep.subr.bf16.mxu0 0
    %322 = vmatpush2.bf16.xpose.msra.mxu0 0
    %323 = vmatprep.subr.bf16.mxu0 0
    %324 = vmatpush2.bf16.xpose.msra.mxu0 0
    %325 = vmatprep.subr.bf16.mxu0 0
    %326 = vmatpush2.bf16.xpose.msra.mxu0 0
    %327 = vmatprep.subr.bf16.mxu0 0
    %328 = vmatpush2.bf16.xpose.msra.mxu0 0
    %329 = vmatprep.subr.bf16.mxu0 0
    %330 = vmatpush2.bf16.xpose.msra.mxu0 0
    %331 = vmatprep.subr.bf16.mxu0 0
    %332 = vmatpush2.bf16.xpose.msra.mxu0 0
    %333 = vmatprep.subr.bf16.mxu0 0
    %334 = vmatpush2.bf16.xpose.msra.mxu0 0
    %335 = vmatprep.subr.bf16.mxu0 0
    %336 = vmatpush2.bf16.xpose.msra.mxu0 0
    %337 = vmatprep.mubr.bf16.mxu0 0
    %338 = vmatmul.mubr.bf16.gmra.mxu0 %v128
    %v339 = vpop.f32.mrf.mxu0
    %v340 = vadd.f32 0.0, %v339
    %v341 = vpop.f32.mrf.mxu0
    %v342 = vpop.f32.mrf.mxu0
    %v343 = vadd.f32 0.0, %v342
    %v344 = vpop.f32.mrf.mxu0
    %345 = vmatprep.mubr.bf16.mxu0 0
    %346 = vmatmul.mubr.bf16.gmra.mxu0 %v129
    %v347 = vpop.f32.mrf.mxu0
    %v348 = vadd.f32 0.0, %v347
    %v349 = vpop.f32.mrf.mxu0
    %v350 = vpop.f32.mrf.mxu0
    %v351 = vadd.f32 0.0, %v350
    %v352 = vpop.f32.mrf.mxu0
    %353 = vmatprep.mubr.bf16.mxu0 0
    %354 = vmatmul.mubr.bf16.gmra.mxu0 %v130
    %v355 = vpop.f32.mrf.mxu0
    %v356 = vadd.f32 0.0, %v355
    %v357 = vpop.f32.mrf.mxu0
    %v358 = vpop.f32.mrf.mxu0
    %v359 = vadd.f32 0.0, %v358
    %v360 = vpop.f32.mrf.mxu0
    %361 = vmatprep.mubr.bf16.mxu0 0
    %362 = vmatmul.mubr.bf16.gmra.mxu0 %v131
    %v363 = vpop.f32.mrf.mxu0
    %v364 = vadd.f32 0.0, %v363
    %v365 = vpop.f32.mrf.mxu0
    %v366 = vpop.f32.mrf.mxu0
    %v367 = vadd.f32 0.0, %v366
    %v368 = vpop.f32.mrf.mxu0
    %369 = vmatprep.mubr.bf16.mxu0 0
    %370 = vmatmul.mubr.bf16.gmra.mxu0 %v132
    %v371 = vpop.f32.mrf.mxu0
    %v372 = vadd.f32 0.0, %v371
    %v373 = vpop.f32.mrf.mxu0
    %v374 = vpop.f32.mrf.mxu0
    %v375 = vadd.f32 0.0, %v374
    %v376 = vpop.f32.mrf.mxu0
    %377 = vmatprep.mubr.bf16.mxu0 0
    %378 = vmatmul.mubr.bf16.gmra.mxu0 %v133
    %v379 = vpop.f32.mrf.mxu0
    %v380 = vadd.f32 0.0, %v379
    %v381 = vpop.f32.mrf.mxu0
    %v382 = vpop.f32.mrf.mxu0
    %v383 = vadd.f32 0.0, %v382
    %v384 = vpop.f32.mrf.mxu0
    %385 = vmatprep.mubr.bf16.mxu0 0
    %386 = vmatmul.mubr.bf16.gmra.mxu0 %v134
    %v387 = vpop.f32.mrf.mxu0
    %v388 = vadd.f32 0.0, %v387
    %v389 = vpop.f32.mrf.mxu0
    %v390 = vpop.f32.mrf.mxu0
    %v391 = vadd.f32 0.0, %v390
    %v392 = vpop.f32.mrf.mxu0
    %393 = vmatprep.mubr.bf16.mxu0 0
    %394 = vmatmul.mubr.bf16.gmra.mxu0 %v135
    %v395 = vpop.f32.mrf.mxu0
    %v396 = vadd.f32 0.0, %v395
    %v397 = vpop.f32.mrf.mxu0
    %v398 = vpop.f32.mrf.mxu0
    %v399 = vadd.f32 0.0, %v398
    %v400 = vpop.f32.mrf.mxu0
    %401 = vdwg.mxu0
    %v402 = vmul.f32 %v340, 5.0
    %v403 = vmul.f32 %v343, 5.0
    %v404 = vmul.f32 %v348, 5.0
    %v405 = vmul.f32 %v351, 5.0
    %v406 = vmul.f32 %v356, 5.0
    %v407 = vmul.f32 %v359, 5.0
    %v408 = vmul.f32 %v364, 5.0
    %v409 = vmul.f32 %v367, 5.0
    %v410 = vmul.f32 %v372, 5.0
    %v411 = vmul.f32 %v375, 5.0
    %v412 = vmul.f32 %v380, 5.0
    %v413 = vmul.f32 %v383, 5.0
    %v414 = vmul.f32 %v388, 5.0
    %v415 = vmul.f32 %v391, 5.0
    %v416 = vmul.f32 %v396, 5.0
    %v417 = vmul.f32 %v399, 5.0
    %v418 = vunpack.c.l.bf16 %v45
    %v419 = vunpack.c.l.bf16 %v46
    %v420 = vunpack.c.l.bf16 %v47
    %v421 = vunpack.c.l.bf16 %v48
    %v422 = vunpack.c.l.bf16 %v49
    %v423 = vunpack.c.l.bf16 %v50
    %v424 = vunpack.c.l.bf16 %v51
    %v425 = vunpack.c.l.bf16 %v52
    %v426 = vunpack.c.l.bf16 %v53
    %v427 = vunpack.c.l.bf16 %v54
    %v428 = vunpack.c.l.bf16 %v55
    %v429 = vunpack.c.l.bf16 %v56
    %v430 = vunpack.c.l.bf16 %v57
    %v431 = vunpack.c.l.bf16 %v58
    %v432 = vunpack.c.l.bf16 %v59
    %v433 = vunpack.c.l.bf16 %v60
    %v434 = vmul.f32 %v418, %v418
    %v435 = vmul.f32 %v419, %v419
    %v436 = vmul.f32 %v420, %v420
    %v437 = vmul.f32 %v421, %v421
    %v438 = vmul.f32 %v422, %v422
    %v439 = vmul.f32 %v423, %v423
    %v440 = vmul.f32 %v424, %v424
    %v441 = vmul.f32 %v425, %v425
    %v442 = vmul.f32 %v426, %v426
    %v443 = vmul.f32 %v427, %v427
    %v444 = vmul.f32 %v428, %v428
    %v445 = vmul.f32 %v429, %v429
    %v446 = vmul.f32 %v430, %v430
    %v447 = vmul.f32 %v431, %v431
    %v448 = vmul.f32 %v432, %v432
    %v449 = vmul.f32 %v433, %v433
    %450 = vadd.xlane.f32.xlu0 %v434
    %v451 = vpop.xlane.xlu0 %450
    %452 = vadd.xlane.f32.xlu0 %v435
    %v453 = vpop.xlane.xlu0 %452
    %454 = vadd.xlane.f32.xlu0 %v436
    %v455 = vpop.xlane.xlu0 %454
    %456 = vadd.xlane.f32.xlu0 %v437
    %v457 = vpop.xlane.xlu0 %456
    %458 = vadd.xlane.f32.xlu0 %v438
    %v459 = vpop.xlane.xlu0 %458
    %460 = vadd.xlane.f32.xlu0 %v439
    %v461 = vpop.xlane.xlu0 %460
    %462 = vadd.xlane.f32.xlu0 %v440
    %v463 = vpop.xlane.xlu0 %462
    %464 = vadd.xlane.f32.xlu0 %v441
    %v465 = vpop.xlane.xlu0 %464
    %466 = vadd.xlane.f32.xlu0 %v442
    %v467 = vpop.xlane.xlu0 %466
    %468 = vadd.xlane.f32.xlu0 %v443
    %v469 = vpop.xlane.xlu0 %468
    %470 = vadd.xlane.f32.xlu0 %v444
    %v471 = vpop.xlane.xlu0 %470
    %472 = vadd.xlane.f32.xlu0 %v445
    %v473 = vpop.xlane.xlu0 %472
    %474 = vadd.xlane.f32.xlu0 %v446
    %v475 = vpop.xlane.xlu0 %474
    %476 = vadd.xlane.f32.xlu0 %v447
    %v477 = vpop.xlane.xlu0 %476
    %478 = vadd.xlane.f32.xlu0 %v448
    %v479 = vpop.xlane.xlu0 %478
    %480 = vadd.xlane.f32.xlu0 %v449
    %v481 = vpop.xlane.xlu0 %480
    %v482 = vmul.f32 %v451, 5.0
    %v483 = vmul.f32 %v453, 5.0
    %v484 = vmul.f32 %v455, 5.0
    %v485 = vmul.f32 %v457, 5.0
    %v486 = vmul.f32 %v459, 5.0
    %v487 = vmul.f32 %v461, 5.0
    %v488 = vmul.f32 %v463, 5.0
    %v489 = vmul.f32 %v465, 5.0
    %v490 = vmul.f32 %v467, 5.0
    %v491 = vmul.f32 %v469, 5.0
    %v492 = vmul.f32 %v471, 5.0
    %v493 = vmul.f32 %v473, 5.0
    %v494 = vmul.f32 %v475, 5.0
    %v495 = vmul.f32 %v477, 5.0
    %v496 = vmul.f32 %v479, 5.0
    %v497 = vmul.f32 %v481, 5.0
    %vm498 = vcmp.ne.s32.totalorder %v62, 8
    %vm499 = vcmp.ne.s32.totalorder %v63, 8
    %vm500 = vcmp.ne.s32.totalorder %v64, 8
    %vm501 = vcmp.ne.s32.totalorder %v65, 8
    %vm502 = vcmp.ne.s32.totalorder %v66, 8
    %vm503 = vcmp.ne.s32.totalorder %v67, 8
    %vm504 = vcmp.ne.s32.totalorder %v68, 8
    %vm505 = vcmp.ne.s32.totalorder %v69, 8
    %vm506 = vcmp.ne.s32.totalorder %v70, 8
    %vm507 = vcmp.ne.s32.totalorder %v71, 8
    %vm508 = vcmp.ne.s32.totalorder %v72, 8
    %vm509 = vcmp.ne.s32.totalorder %v73, 8
    %vm510 = vcmp.ne.s32.totalorder %v74, 8
    %vm511 = vcmp.ne.s32.totalorder %v75, 8
    %vm512 = vcmp.ne.s32.totalorder %v76, 8
    %vm513 = vcmp.ne.s32.totalorder %v77, 8
    %514 = vset.pattern.permute.xlu0 0
    %515 = vperm.xlu0 %514, %v62
    %v516 = vpop.permute.xlu0 %515
    %517 = vset.pattern.permute.xlu0 0
    %518 = vperm.xlu0 %517, %v63
    %v519 = vpop.permute.xlu0 %518
    %520 = vset.pattern.permute.xlu0 0
    %521 = vperm.xlu0 %520, %v64
    %v522 = vpop.permute.xlu0 %521
    %523 = vset.pattern.permute.xlu0 0
    %524 = vperm.xlu0 %523, %v65
    %v525 = vpop.permute.xlu0 %524
    %526 = vset.pattern.permute.xlu0 0
    %527 = vperm.xlu0 %526, %v66
    %v528 = vpop.permute.xlu0 %527
    %529 = vset.pattern.permute.xlu0 0
    %530 = vperm.xlu0 %529, %v67
    %v531 = vpop.permute.xlu0 %530
    %532 = vset.pattern.permute.xlu0 0
    %533 = vperm.xlu0 %532, %v68
    %v534 = vpop.permute.xlu0 %533
    %535 = vset.pattern.permute.xlu0 0
    %536 = vperm.xlu0 %535, %v69
    %v537 = vpop.permute.xlu0 %536
    %538 = vset.pattern.permute.xlu0 0
    %539 = vperm.xlu0 %538, %v70
    %v540 = vpop.permute.xlu0 %539
    %541 = vset.pattern.permute.xlu0 0
    %542 = vperm.xlu0 %541, %v71
    %v543 = vpop.permute.xlu0 %542
    %544 = vset.pattern.permute.xlu0 0
    %545 = vperm.xlu0 %544, %v72
    %v546 = vpop.permute.xlu0 %545
    %547 = vset.pattern.permute.xlu0 0
    %548 = vperm.xlu0 %547, %v73
    %v549 = vpop.permute.xlu0 %548
    %550 = vset.pattern.permute.xlu0 0
    %551 = vperm.xlu0 %550, %v74
    %v552 = vpop.permute.xlu0 %551
    %553 = vset.pattern.permute.xlu0 0
    %554 = vperm.xlu0 %553, %v75
    %v555 = vpop.permute.xlu0 %554
    %556 = vset.pattern.permute.xlu0 0
    %557 = vperm.xlu0 %556, %v76
    %v558 = vpop.permute.xlu0 %557
    %559 = vset.pattern.permute.xlu0 0
    %560 = vperm.xlu0 %559, %v77
    %v561 = vpop.permute.xlu0 %560
    %v562 = vlaneseq
    %v563 = vshrl.u32 %v562, 7
    %v564 = vsub.s32 0, %v563
    %v565 = vrot.slane %v78, %v564
    %vm566 = vcmp.eq.s32.totalorder %v516, %v565
    %vm567 = vcmp.eq.s32.totalorder %v519, %v565
    %vm568 = vcmp.eq.s32.totalorder %v522, %v565
    %vm569 = vcmp.eq.s32.totalorder %v525, %v565
    %vm570 = vcmp.eq.s32.totalorder %v528, %v565
    %vm571 = vcmp.eq.s32.totalorder %v531, %v565
    %vm572 = vcmp.eq.s32.totalorder %v534, %v565
    %vm573 = vcmp.eq.s32.totalorder %v537, %v565
    %vm574 = vcmp.eq.s32.totalorder %v540, %v565
    %vm575 = vcmp.eq.s32.totalorder %v543, %v565
    %vm576 = vcmp.eq.s32.totalorder %v546, %v565
    %vm577 = vcmp.eq.s32.totalorder %v549, %v565
    %vm578 = vcmp.eq.s32.totalorder %v552, %v565
    %vm579 = vcmp.eq.s32.totalorder %v555, %v565
    %vm580 = vcmp.eq.s32.totalorder %v558, %v565
    %vm581 = vcmp.eq.s32.totalorder %v561, %v565
    %v582 = vsel %vm566, 1, 0
    %v583 = vsel %vm567, 1, 0
    %v584 = vsel %vm568, 1, 0
    %v585 = vsel %vm569, 1, 0
    %v586 = vsel %vm570, 1, 0
    %v587 = vsel %vm571, 1, 0
    %v588 = vsel %vm572, 1, 0
    %v589 = vsel %vm573, 1, 0
    %v590 = vsel %vm574, 1, 0
    %v591 = vsel %vm575, 1, 0
    %v592 = vsel %vm576, 1, 0
    %v593 = vsel %vm577, 1, 0
    %v594 = vsel %vm578, 1, 0
    %v595 = vsel %vm579, 1, 0
    %v596 = vsel %vm580, 1, 0
    %v597 = vsel %vm581, 1, 0
    %v598 = vcvt.s32.f32 %v582
    %v599 = vcvt.s32.f32 %v583
    %v600 = vcvt.s32.f32 %v584
    %v601 = vcvt.s32.f32 %v585
    %v602 = vcvt.s32.f32 %v586
    %v603 = vcvt.s32.f32 %v587
    %v604 = vcvt.s32.f32 %v588
    %v605 = vcvt.s32.f32 %v589
    %v606 = vcvt.s32.f32 %v590
    %v607 = vcvt.s32.f32 %v591
    %v608 = vcvt.s32.f32 %v592
    %v609 = vcvt.s32.f32 %v593
    %v610 = vcvt.s32.f32 %v594
    %v611 = vcvt.s32.f32 %v595
    %v612 = vcvt.s32.f32 %v596
    %v613 = vcvt.s32.f32 %v597
    %vm614 = vcmask 31744
    %v615 = vsel %vm614, %v598, 0.0
    %616 = vadd.xlane.f32.xlu0 %v615
    %v617 = vpop.xlane.xlu0 %616
    %v618 = vsel %vm614, %v599, 0.0
    %619 = vadd.xlane.f32.xlu0 %v618
    %v620 = vpop.xlane.xlu0 %619
    %v621 = vsel %vm614, %v600, 0.0
    %622 = vadd.xlane.f32.xlu0 %v621
    %v623 = vpop.xlane.xlu0 %622
    %v624 = vsel %vm614, %v601, 0.0
    %625 = vadd.xlane.f32.xlu0 %v624
    %v626 = vpop.xlane.xlu0 %625
    %v627 = vsel %vm614, %v602, 0.0
    %628 = vadd.xlane.f32.xlu0 %v627
    %v629 = vpop.xlane.xlu0 %628
    %v630 = vsel %vm614, %v603, 0.0
    %631 = vadd.xlane.f32.xlu0 %v630
    %v632 = vpop.xlane.xlu0 %631
    %v633 = vsel %vm614, %v604, 0.0
    %634 = vadd.xlane.f32.xlu0 %v633
    %v635 = vpop.xlane.xlu0 %634
    %v636 = vsel %vm614, %v605, 0.0
    %637 = vadd.xlane.f32.xlu0 %v636
    %v638 = vpop.xlane.xlu0 %637
    %v639 = vsel %vm614, %v606, 0.0
    %640 = vadd.xlane.f32.xlu0 %v639
    %v641 = vpop.xlane.xlu0 %640
    %v642 = vsel %vm614, %v607, 0.0
    %643 = vadd.xlane.f32.xlu0 %v642
    %v644 = vpop.xlane.xlu0 %643
    %v645 = vsel %vm614, %v608, 0.0
    %646 = vadd.xlane.f32.xlu0 %v645
    %v647 = vpop.xlane.xlu0 %646
    %v648 = vsel %vm614, %v609, 0.0
    %649 = vadd.xlane.f32.xlu0 %v648
    %v650 = vpop.xlane.xlu0 %649
    %v651 = vsel %vm614, %v610, 0.0
    %652 = vadd.xlane.f32.xlu0 %v651
    %v653 = vpop.xlane.xlu0 %652
    %v654 = vsel %vm614, %v611, 0.0
    %655 = vadd.xlane.f32.xlu0 %v654
    %v656 = vpop.xlane.xlu0 %655
    %v657 = vsel %vm614, %v612, 0.0
    %658 = vadd.xlane.f32.xlu0 %v657
    %v659 = vpop.xlane.xlu0 %658
    %v660 = vsel %vm614, %v613, 0.0
    %661 = vadd.xlane.f32.xlu0 %v660
    %v662 = vpop.xlane.xlu0 %661
    %vm663 = vcmp.gt.f32.partialorder %v617, 0.0
    %vm664 = vcmp.gt.f32.partialorder %v620, 0.0
    %vm665 = vcmp.gt.f32.partialorder %v623, 0.0
    %vm666 = vcmp.gt.f32.partialorder %v626, 0.0
    %vm667 = vcmp.gt.f32.partialorder %v629, 0.0
    %vm668 = vcmp.gt.f32.partialorder %v632, 0.0
    %vm669 = vcmp.gt.f32.partialorder %v635, 0.0
    %vm670 = vcmp.gt.f32.partialorder %v638, 0.0
    %vm671 = vcmp.gt.f32.partialorder %v641, 0.0
    %vm672 = vcmp.gt.f32.partialorder %v644, 0.0
    %vm673 = vcmp.gt.f32.partialorder %v647, 0.0
    %vm674 = vcmp.gt.f32.partialorder %v650, 0.0
    %vm675 = vcmp.gt.f32.partialorder %v653, 0.0
    %vm676 = vcmp.gt.f32.partialorder %v656, 0.0
    %vm677 = vcmp.gt.f32.partialorder %v659, 0.0
    %vm678 = vcmp.gt.f32.partialorder %v662, 0.0
    %vm679 = vmxor %vm663, 1
    %vm680 = vmxor %vm664, 1
    %vm681 = vmxor %vm665, 1
    %vm682 = vmxor %vm666, 1
    %vm683 = vmxor %vm667, 1
    %vm684 = vmxor %vm668, 1
    %vm685 = vmxor %vm669, 1
    %vm686 = vmxor %vm670, 1
    %vm687 = vmxor %vm671, 1
    %vm688 = vmxor %vm672, 1
    %vm689 = vmxor %vm673, 1
    %vm690 = vmxor %vm674, 1
    %vm691 = vmxor %vm675, 1
    %vm692 = vmxor %vm676, 1
    %vm693 = vmxor %vm677, 1
    %vm694 = vmxor %vm678, 1
    %vm695 = vmand %vm498, %vm679
    %vm696 = vmand %vm499, %vm680
    %vm697 = vmand %vm500, %vm681
    %vm698 = vmand %vm501, %vm682
    %vm699 = vmand %vm502, %vm683
    %vm700 = vmand %vm503, %vm684
    %vm701 = vmand %vm504, %vm685
    %vm702 = vmand %vm505, %vm686
    %vm703 = vmand %vm506, %vm687
    %vm704 = vmand %vm507, %vm688
    %vm705 = vmand %vm508, %vm689
    %vm706 = vmand %vm509, %vm690
    %vm707 = vmand %vm510, %vm691
    %vm708 = vmand %vm511, %vm692
    %vm709 = vmand %vm512, %vm693
    %vm710 = vmand %vm513, %vm694
    %v711 = vsel %vm695, 1, 0
    %v712 = vsel %vm696, 1, 0
    %v713 = vsel %vm697, 1, 0
    %v714 = vsel %vm698, 1, 0
    %v715 = vsel %vm699, 1, 0
    %v716 = vsel %vm700, 1, 0
    %v717 = vsel %vm701, 1, 0
    %v718 = vsel %vm702, 1, 0
    %v719 = vsel %vm703, 1, 0
    %v720 = vsel %vm704, 1, 0
    %v721 = vsel %vm705, 1, 0
    %v722 = vsel %vm706, 1, 0
    %v723 = vsel %vm707, 1, 0
    %v724 = vsel %vm708, 1, 0
    %v725 = vsel %vm709, 1, 0
    %v726 = vsel %vm710, 1, 0
    %v727 = vcvt.s32.f32 %v711
    %v728 = vcvt.s32.f32 %v712
    %v729 = vcvt.s32.f32 %v713
    %v730 = vcvt.s32.f32 %v714
    %v731 = vcvt.s32.f32 %v715
    %v732 = vcvt.s32.f32 %v716
    %v733 = vcvt.s32.f32 %v717
    %v734 = vcvt.s32.f32 %v718
    %v735 = vcvt.s32.f32 %v719
    %v736 = vcvt.s32.f32 %v720
    %v737 = vcvt.s32.f32 %v721
    %v738 = vcvt.s32.f32 %v722
    %v739 = vcvt.s32.f32 %v723
    %v740 = vcvt.s32.f32 %v724
    %v741 = vcvt.s32.f32 %v725
    %v742 = vcvt.s32.f32 %v726
    %vm743 = vmand %vm498, %vm663
    %vm744 = vmand %vm499, %vm664
    %vm745 = vmand %vm500, %vm665
    %vm746 = vmand %vm501, %vm666
    %vm747 = vmand %vm502, %vm667
    %vm748 = vmand %vm503, %vm668
    %vm749 = vmand %vm504, %vm669
    %vm750 = vmand %vm505, %vm670
    %vm751 = vmand %vm506, %vm671
    %vm752 = vmand %vm507, %vm672
    %vm753 = vmand %vm508, %vm673
    %vm754 = vmand %vm509, %vm674
    %vm755 = vmand %vm510, %vm675
    %vm756 = vmand %vm511, %vm676
    %vm757 = vmand %vm512, %vm677
    %vm758 = vmand %vm513, %vm678
    %v759 = vsel %vm743, 1, 0
    %v760 = vsel %vm744, 1, 0
    %v761 = vsel %vm745, 1, 0
    %v762 = vsel %vm746, 1, 0
    %v763 = vsel %vm747, 1, 0
    %v764 = vsel %vm748, 1, 0
    %v765 = vsel %vm749, 1, 0
    %v766 = vsel %vm750, 1, 0
    %v767 = vsel %vm751, 1, 0
    %v768 = vsel %vm752, 1, 0
    %v769 = vsel %vm753, 1, 0
    %v770 = vsel %vm754, 1, 0
    %v771 = vsel %vm755, 1, 0
    %v772 = vsel %vm756, 1, 0
    %v773 = vsel %vm757, 1, 0
    %v774 = vsel %vm758, 1, 0
    %v775 = vcvt.s32.f32 %v759
    %v776 = vcvt.s32.f32 %v760
    %v777 = vcvt.s32.f32 %v761
    %v778 = vcvt.s32.f32 %v762
    %v779 = vcvt.s32.f32 %v763
    %v780 = vcvt.s32.f32 %v764
    %v781 = vcvt.s32.f32 %v765
    %v782 = vcvt.s32.f32 %v766
    %v783 = vcvt.s32.f32 %v767
    %v784 = vcvt.s32.f32 %v768
    %v785 = vcvt.s32.f32 %v769
    %v786 = vcvt.s32.f32 %v770
    %v787 = vcvt.s32.f32 %v771
    %v788 = vcvt.s32.f32 %v772
    %v789 = vcvt.s32.f32 %v773
    %v790 = vcvt.s32.f32 %v774
    %v791 = vmul.f32 %v289, 1.442695
    %v792 = vpow.pop %v791
    %v793 = vmul.f32 %v290, 1.442695
    %v794 = vpow.pop %v793
    %v795 = vmul.f32 %v291, 1.442695
    %v796 = vpow.pop %v795
    %v797 = vmul.f32 %v292, 1.442695
    %v798 = vpow.pop %v797
    %v799 = vmul.f32 %v293, 1.442695
    %v800 = vpow.pop %v799
    %v801 = vmul.f32 %v294, 1.442695
    %v802 = vpow.pop %v801
    %v803 = vmul.f32 %v295, 1.442695
    %v804 = vpow.pop %v803
    %v805 = vmul.f32 %v296, 1.442695
    %v806 = vpow.pop %v805
    %v807 = vmul.f32 %v297, 1.442695
    %v808 = vpow.pop %v807
    %v809 = vmul.f32 %v298, 1.442695
    %v810 = vpow.pop %v809
    %v811 = vmul.f32 %v299, 1.442695
    %v812 = vpow.pop %v811
    %v813 = vmul.f32 %v300, 1.442695
    %v814 = vpow.pop %v813
    %v815 = vmul.f32 %v301, 1.442695
    %v816 = vpow.pop %v815
    %v817 = vmul.f32 %v302, 1.442695
    %v818 = vpow.pop %v817
    %v819 = vmul.f32 %v303, 1.442695
    %v820 = vpow.pop %v819
    %v821 = vmul.f32 %v304, 1.442695
    %v822 = vpow.pop %v821
    %v824 = vlaneseq
    %v825 = vshrl.u32 %v824, 7
    %v826 = vsub.s32 0, %v825
    %v827 = vrot.slane %v79, %v826
    %v829 = vmul.f32 %v792, %v827
    %v830 = vmul.f32 %v794, %v827
    %v831 = vmul.f32 %v796, %v827
    %v832 = vmul.f32 %v798, %v827
    %v833 = vmul.f32 %v800, %v827
    %v834 = vmul.f32 %v802, %v827
    %v835 = vmul.f32 %v804, %v827
    %v836 = vmul.f32 %v806, %v827
    %v837 = vmul.f32 %v808, %v827
    %v838 = vmul.f32 %v810, %v827
    %v839 = vmul.f32 %v812, %v827
    %v840 = vmul.f32 %v814, %v827
    %v841 = vmul.f32 %v816, %v827
    %v842 = vmul.f32 %v818, %v827
    %v843 = vmul.f32 %v820, %v827
    %v844 = vmul.f32 %v822, %v827
    %845 = vadd.xlane.f32.xlu0 %v829
    %v846 = vpop.xlane.xlu0 %845
    %847 = vadd.xlane.f32.xlu0 %v830
    %v848 = vpop.xlane.xlu0 %847
    %849 = vadd.xlane.f32.xlu0 %v831
    %v850 = vpop.xlane.xlu0 %849
    %851 = vadd.xlane.f32.xlu0 %v832
    %v852 = vpop.xlane.xlu0 %851
    %853 = vadd.xlane.f32.xlu0 %v833
    %v854 = vpop.xlane.xlu0 %853
    %855 = vadd.xlane.f32.xlu0 %v834
    %v856 = vpop.xlane.xlu0 %855
    %857 = vadd.xlane.f32.xlu0 %v835
    %v858 = vpop.xlane.xlu0 %857
    %859 = vadd.xlane.f32.xlu0 %v836
    %v860 = vpop.xlane.xlu0 %859
    %861 = vadd.xlane.f32.xlu0 %v837
    %v862 = vpop.xlane.xlu0 %861
    %863 = vadd.xlane.f32.xlu0 %v838
    %v864 = vpop.xlane.xlu0 %863
    %865 = vadd.xlane.f32.xlu0 %v839
    %v866 = vpop.xlane.xlu0 %865
    %867 = vadd.xlane.f32.xlu0 %v840
    %v868 = vpop.xlane.xlu0 %867
    %869 = vadd.xlane.f32.xlu0 %v841
    %v870 = vpop.xlane.xlu0 %869
    %871 = vadd.xlane.f32.xlu0 %v842
    %v872 = vpop.xlane.xlu0 %871
    %873 = vadd.xlane.f32.xlu0 %v843
    %v874 = vpop.xlane.xlu0 %873
    %875 = vadd.xlane.f32.xlu0 %v844
    %v876 = vpop.xlane.xlu0 %875
    %v877 = vmul.f32 %v289, %v827
    %v878 = vmul.f32 %v290, %v827
    %v879 = vmul.f32 %v291, %v827
    %v880 = vmul.f32 %v292, %v827
    %v881 = vmul.f32 %v293, %v827
    %v882 = vmul.f32 %v294, %v827
    %v883 = vmul.f32 %v295, %v827
    %v884 = vmul.f32 %v296, %v827
    %v885 = vmul.f32 %v297, %v827
    %v886 = vmul.f32 %v298, %v827
    %v887 = vmul.f32 %v299, %v827
    %v888 = vmul.f32 %v300, %v827
    %v889 = vmul.f32 %v301, %v827
    %v890 = vmul.f32 %v302, %v827
    %v891 = vmul.f32 %v303, %v827
    %v892 = vmul.f32 %v304, %v827
    %893 = vadd.xlane.f32.xlu0 %v877
    %v894 = vpop.xlane.xlu0 %893
    %895 = vadd.xlane.f32.xlu0 %v878
    %v896 = vpop.xlane.xlu0 %895
    %897 = vadd.xlane.f32.xlu0 %v879
    %v898 = vpop.xlane.xlu0 %897
    %899 = vadd.xlane.f32.xlu0 %v880
    %v900 = vpop.xlane.xlu0 %899
    %901 = vadd.xlane.f32.xlu0 %v881
    %v902 = vpop.xlane.xlu0 %901
    %903 = vadd.xlane.f32.xlu0 %v882
    %v904 = vpop.xlane.xlu0 %903
    %905 = vadd.xlane.f32.xlu0 %v883
    %v906 = vpop.xlane.xlu0 %905
    %907 = vadd.xlane.f32.xlu0 %v884
    %v908 = vpop.xlane.xlu0 %907
    %909 = vadd.xlane.f32.xlu0 %v885
    %v910 = vpop.xlane.xlu0 %909
    %911 = vadd.xlane.f32.xlu0 %v886
    %v912 = vpop.xlane.xlu0 %911
    %913 = vadd.xlane.f32.xlu0 %v887
    %v914 = vpop.xlane.xlu0 %913
    %915 = vadd.xlane.f32.xlu0 %v888
    %v916 = vpop.xlane.xlu0 %915
    %917 = vadd.xlane.f32.xlu0 %v889
    %v918 = vpop.xlane.xlu0 %917
    %919 = vadd.xlane.f32.xlu0 %v890
    %v920 = vpop.xlane.xlu0 %919
    %921 = vadd.xlane.f32.xlu0 %v891
    %v922 = vpop.xlane.xlu0 %921
    %923 = vadd.xlane.f32.xlu0 %v892
    %v924 = vpop.xlane.xlu0 %923
    %v925 = vsel %vm614, %v402, 0.0
    %926 = vadd.xlane.f32.xlu0 %v925
    %v927 = vpop.xlane.xlu0 %926
    %v928 = vsel %vm614, %v403, 0.0
    %929 = vadd.xlane.f32.xlu0 %v928
    %v930 = vpop.xlane.xlu0 %929
    %v931 = vsel %vm614, %v404, 0.0
    %932 = vadd.xlane.f32.xlu0 %v931
    %v933 = vpop.xlane.xlu0 %932
    %v934 = vsel %vm614, %v405, 0.0
    %935 = vadd.xlane.f32.xlu0 %v934
    %v936 = vpop.xlane.xlu0 %935
    %v937 = vsel %vm614, %v406, 0.0
    %938 = vadd.xlane.f32.xlu0 %v937
    %v939 = vpop.xlane.xlu0 %938
    %v940 = vsel %vm614, %v407, 0.0
    %941 = vadd.xlane.f32.xlu0 %v940
    %v942 = vpop.xlane.xlu0 %941
    %v943 = vsel %vm614, %v408, 0.0
    %944 = vadd.xlane.f32.xlu0 %v943
    %v945 = vpop.xlane.xlu0 %944
    %v946 = vsel %vm614, %v409, 0.0
    %947 = vadd.xlane.f32.xlu0 %v946
    %v948 = vpop.xlane.xlu0 %947
    %v949 = vsel %vm614, %v410, 0.0
    %950 = vadd.xlane.f32.xlu0 %v949
    %v951 = vpop.xlane.xlu0 %950
    %v952 = vsel %vm614, %v411, 0.0
    %953 = vadd.xlane.f32.xlu0 %v952
    %v954 = vpop.xlane.xlu0 %953
    %v955 = vsel %vm614, %v412, 0.0
    %956 = vadd.xlane.f32.xlu0 %v955
    %v957 = vpop.xlane.xlu0 %956
    %v958 = vsel %vm614, %v413, 0.0
    %959 = vadd.xlane.f32.xlu0 %v958
    %v960 = vpop.xlane.xlu0 %959
    %v961 = vsel %vm614, %v414, 0.0
    %962 = vadd.xlane.f32.xlu0 %v961
    %v963 = vpop.xlane.xlu0 %962
    %v964 = vsel %vm614, %v415, 0.0
    %965 = vadd.xlane.f32.xlu0 %v964
    %v966 = vpop.xlane.xlu0 %965
    %v967 = vsel %vm614, %v416, 0.0
    %968 = vadd.xlane.f32.xlu0 %v967
    %v969 = vpop.xlane.xlu0 %968
    %v970 = vsel %vm614, %v417, 0.0
    %971 = vadd.xlane.f32.xlu0 %v970
    %v972 = vpop.xlane.xlu0 %971
    %v973 = vmul.f32 %v402, 1.442695
    %v974 = vpow.pop %v973
    %v975 = vmul.f32 %v403, 1.442695
    %v976 = vpow.pop %v975
    %v977 = vmul.f32 %v404, 1.442695
    %v978 = vpow.pop %v977
    %v979 = vmul.f32 %v405, 1.442695
    %v980 = vpow.pop %v979
    %v981 = vmul.f32 %v406, 1.442695
    %v982 = vpow.pop %v981
    %v983 = vmul.f32 %v407, 1.442695
    %v984 = vpow.pop %v983
    %v985 = vmul.f32 %v408, 1.442695
    %v986 = vpow.pop %v985
    %v987 = vmul.f32 %v409, 1.442695
    %v988 = vpow.pop %v987
    %v989 = vmul.f32 %v410, 1.442695
    %v990 = vpow.pop %v989
    %v991 = vmul.f32 %v411, 1.442695
    %v992 = vpow.pop %v991
    %v993 = vmul.f32 %v412, 1.442695
    %v994 = vpow.pop %v993
    %v995 = vmul.f32 %v413, 1.442695
    %v996 = vpow.pop %v995
    %v997 = vmul.f32 %v414, 1.442695
    %v998 = vpow.pop %v997
    %v999 = vmul.f32 %v415, 1.442695
    %v1000 = vpow.pop %v999
    %v1001 = vmul.f32 %v416, 1.442695
    %v1002 = vpow.pop %v1001
    %v1003 = vmul.f32 %v417, 1.442695
    %v1004 = vpow.pop %v1003
    %v1005 = vsel %vm614, %v974, 0.0
    %1006 = vadd.xlane.f32.xlu0 %v1005
    %v1007 = vpop.xlane.xlu0 %1006
    %v1008 = vsel %vm614, %v976, 0.0
    %1009 = vadd.xlane.f32.xlu0 %v1008
    %v1010 = vpop.xlane.xlu0 %1009
    %v1011 = vsel %vm614, %v978, 0.0
    %1012 = vadd.xlane.f32.xlu0 %v1011
    %v1013 = vpop.xlane.xlu0 %1012
    %v1014 = vsel %vm614, %v980, 0.0
    %1015 = vadd.xlane.f32.xlu0 %v1014
    %v1016 = vpop.xlane.xlu0 %1015
    %v1017 = vsel %vm614, %v982, 0.0
    %1018 = vadd.xlane.f32.xlu0 %v1017
    %v1019 = vpop.xlane.xlu0 %1018
    %v1020 = vsel %vm614, %v984, 0.0
    %1021 = vadd.xlane.f32.xlu0 %v1020
    %v1022 = vpop.xlane.xlu0 %1021
    %v1023 = vsel %vm614, %v986, 0.0
    %1024 = vadd.xlane.f32.xlu0 %v1023
    %v1025 = vpop.xlane.xlu0 %1024
    %v1026 = vsel %vm614, %v988, 0.0
    %1027 = vadd.xlane.f32.xlu0 %v1026
    %v1028 = vpop.xlane.xlu0 %1027
    %v1029 = vsel %vm614, %v990, 0.0
    %1030 = vadd.xlane.f32.xlu0 %v1029
    %v1031 = vpop.xlane.xlu0 %1030
    %v1032 = vsel %vm614, %v992, 0.0
    %1033 = vadd.xlane.f32.xlu0 %v1032
    %v1034 = vpop.xlane.xlu0 %1033
    %v1035 = vsel %vm614, %v994, 0.0
    %1036 = vadd.xlane.f32.xlu0 %v1035
    %v1037 = vpop.xlane.xlu0 %1036
    %v1038 = vsel %vm614, %v996, 0.0
    %1039 = vadd.xlane.f32.xlu0 %v1038
    %v1040 = vpop.xlane.xlu0 %1039
    %v1041 = vsel %vm614, %v998, 0.0
    %1042 = vadd.xlane.f32.xlu0 %v1041
    %v1043 = vpop.xlane.xlu0 %1042
    %v1044 = vsel %vm614, %v1000, 0.0
    %1045 = vadd.xlane.f32.xlu0 %v1044
    %v1046 = vpop.xlane.xlu0 %1045
    %v1047 = vsel %vm614, %v1002, 0.0
    %1048 = vadd.xlane.f32.xlu0 %v1047
    %v1049 = vpop.xlane.xlu0 %1048
    %v1050 = vsel %vm614, %v1004, 0.0
    %1051 = vadd.xlane.f32.xlu0 %v1050
    %v1052 = vpop.xlane.xlu0 %1051
    %v1053 = vlaneseq
    %v1054 = vand.u32 %v1053, 127
    %vm1055 = vcmp.eq.s32.totalorder %v1054, %v516
    %vm1056 = vcmp.eq.s32.totalorder %v1054, %v519
    %vm1057 = vcmp.eq.s32.totalorder %v1054, %v522
    %vm1058 = vcmp.eq.s32.totalorder %v1054, %v525
    %vm1059 = vcmp.eq.s32.totalorder %v1054, %v528
    %vm1060 = vcmp.eq.s32.totalorder %v1054, %v531
    %vm1061 = vcmp.eq.s32.totalorder %v1054, %v534
    %vm1062 = vcmp.eq.s32.totalorder %v1054, %v537
    %vm1063 = vcmp.eq.s32.totalorder %v1054, %v540
    %vm1064 = vcmp.eq.s32.totalorder %v1054, %v543
    %vm1065 = vcmp.eq.s32.totalorder %v1054, %v546
    %vm1066 = vcmp.eq.s32.totalorder %v1054, %v549
    %vm1067 = vcmp.eq.s32.totalorder %v1054, %v552
    %vm1068 = vcmp.eq.s32.totalorder %v1054, %v555
    %vm1069 = vcmp.eq.s32.totalorder %v1054, %v558
    %vm1070 = vcmp.eq.s32.totalorder %v1054, %v561
    %v1071 = vsel %vm1055, 1, 0
    %v1072 = vsel %vm1056, 1, 0
    %v1073 = vsel %vm1057, 1, 0
    %v1074 = vsel %vm1058, 1, 0
    %v1075 = vsel %vm1059, 1, 0
    %v1076 = vsel %vm1060, 1, 0
    %v1077 = vsel %vm1061, 1, 0
    %v1078 = vsel %vm1062, 1, 0
    %v1079 = vsel %vm1063, 1, 0
    %v1080 = vsel %vm1064, 1, 0
    %v1081 = vsel %vm1065, 1, 0
    %v1082 = vsel %vm1066, 1, 0
    %v1083 = vsel %vm1067, 1, 0
    %v1084 = vsel %vm1068, 1, 0
    %v1085 = vsel %vm1069, 1, 0
    %v1086 = vsel %vm1070, 1, 0
    %v1087 = vcvt.s32.f32 %v1071
    %v1088 = vcvt.s32.f32 %v1072
    %v1089 = vcvt.s32.f32 %v1073
    %v1090 = vcvt.s32.f32 %v1074
    %v1091 = vcvt.s32.f32 %v1075
    %v1092 = vcvt.s32.f32 %v1076
    %v1093 = vcvt.s32.f32 %v1077
    %v1094 = vcvt.s32.f32 %v1078
    %v1095 = vcvt.s32.f32 %v1079
    %v1096 = vcvt.s32.f32 %v1080
    %v1097 = vcvt.s32.f32 %v1081
    %v1098 = vcvt.s32.f32 %v1082
    %v1099 = vcvt.s32.f32 %v1083
    %v1100 = vcvt.s32.f32 %v1084
    %v1101 = vcvt.s32.f32 %v1085
    %v1102 = vcvt.s32.f32 %v1086
    %v1103 = vmul.f32 %v402, %v1087
    %v1104 = vmul.f32 %v403, %v1088
    %v1105 = vmul.f32 %v404, %v1089
    %v1106 = vmul.f32 %v405, %v1090
    %v1107 = vmul.f32 %v406, %v1091
    %v1108 = vmul.f32 %v407, %v1092
    %v1109 = vmul.f32 %v408, %v1093
    %v1110 = vmul.f32 %v409, %v1094
    %v1111 = vmul.f32 %v410, %v1095
    %v1112 = vmul.f32 %v411, %v1096
    %v1113 = vmul.f32 %v412, %v1097
    %v1114 = vmul.f32 %v413, %v1098
    %v1115 = vmul.f32 %v414, %v1099
    %v1116 = vmul.f32 %v415, %v1100
    %v1117 = vmul.f32 %v416, %v1101
    %v1118 = vmul.f32 %v417, %v1102
    %v1119 = vsel %vm614, %v1103, 0.0
    %1120 = vadd.xlane.f32.xlu0 %v1119
    %v1121 = vpop.xlane.xlu0 %1120
    %v1122 = vsel %vm614, %v1104, 0.0
    %1123 = vadd.xlane.f32.xlu0 %v1122
    %v1124 = vpop.xlane.xlu0 %1123
    %v1125 = vsel %vm614, %v1105, 0.0
    %1126 = vadd.xlane.f32.xlu0 %v1125
    %v1127 = vpop.xlane.xlu0 %1126
    %v1128 = vsel %vm614, %v1106, 0.0
    %1129 = vadd.xlane.f32.xlu0 %v1128
    %v1130 = vpop.xlane.xlu0 %1129
    %v1131 = vsel %vm614, %v1107, 0.0
    %1132 = vadd.xlane.f32.xlu0 %v1131
    %v1133 = vpop.xlane.xlu0 %1132
    %v1134 = vsel %vm614, %v1108, 0.0
    %1135 = vadd.xlane.f32.xlu0 %v1134
    %v1136 = vpop.xlane.xlu0 %1135
    %v1137 = vsel %vm614, %v1109, 0.0
    %1138 = vadd.xlane.f32.xlu0 %v1137
    %v1139 = vpop.xlane.xlu0 %1138
    %v1140 = vsel %vm614, %v1110, 0.0
    %1141 = vadd.xlane.f32.xlu0 %v1140
    %v1142 = vpop.xlane.xlu0 %1141
    %v1143 = vsel %vm614, %v1111, 0.0
    %1144 = vadd.xlane.f32.xlu0 %v1143
    %v1145 = vpop.xlane.xlu0 %1144
    %v1146 = vsel %vm614, %v1112, 0.0
    %1147 = vadd.xlane.f32.xlu0 %v1146
    %v1148 = vpop.xlane.xlu0 %1147
    %v1149 = vsel %vm614, %v1113, 0.0
    %1150 = vadd.xlane.f32.xlu0 %v1149
    %v1151 = vpop.xlane.xlu0 %1150
    %v1152 = vsel %vm614, %v1114, 0.0
    %1153 = vadd.xlane.f32.xlu0 %v1152
    %v1154 = vpop.xlane.xlu0 %1153
    %v1155 = vsel %vm614, %v1115, 0.0
    %1156 = vadd.xlane.f32.xlu0 %v1155
    %v1157 = vpop.xlane.xlu0 %1156
    %v1158 = vsel %vm614, %v1116, 0.0
    %1159 = vadd.xlane.f32.xlu0 %v1158
    %v1160 = vpop.xlane.xlu0 %1159
    %v1161 = vsel %vm614, %v1117, 0.0
    %1162 = vadd.xlane.f32.xlu0 %v1161
    %v1163 = vpop.xlane.xlu0 %1162
    %v1164 = vsel %vm614, %v1118, 0.0
    %1165 = vadd.xlane.f32.xlu0 %v1164
    %v1166 = vpop.xlane.xlu0 %1165
    %v1167 = vmul.f32 %v482, 1.442695
    %v1168 = vpow.pop %v1167
    %v1169 = vmul.f32 %v483, 1.442695
    %v1170 = vpow.pop %v1169
    %v1171 = vmul.f32 %v484, 1.442695
    %v1172 = vpow.pop %v1171
    %v1173 = vmul.f32 %v485, 1.442695
    %v1174 = vpow.pop %v1173
    %v1175 = vmul.f32 %v486, 1.442695
    %v1176 = vpow.pop %v1175
    %v1177 = vmul.f32 %v487, 1.442695
    %v1178 = vpow.pop %v1177
    %v1179 = vmul.f32 %v488, 1.442695
    %v1180 = vpow.pop %v1179
    %v1181 = vmul.f32 %v489, 1.442695
    %v1182 = vpow.pop %v1181
    %v1183 = vmul.f32 %v490, 1.442695
    %v1184 = vpow.pop %v1183
    %v1185 = vmul.f32 %v491, 1.442695
    %v1186 = vpow.pop %v1185
    %v1187 = vmul.f32 %v492, 1.442695
    %v1188 = vpow.pop %v1187
    %v1189 = vmul.f32 %v493, 1.442695
    %v1190 = vpow.pop %v1189
    %v1191 = vmul.f32 %v494, 1.442695
    %v1192 = vpow.pop %v1191
    %v1193 = vmul.f32 %v495, 1.442695
    %v1194 = vpow.pop %v1193
    %v1195 = vmul.f32 %v496, 1.442695
    %v1196 = vpow.pop %v1195
    %v1197 = vmul.f32 %v497, 1.442695
    %v1198 = vpow.pop %v1197
    %v1199 = vsub.f32 %v846, %v1168
    %v1200 = vsub.f32 %v848, %v1170
    %v1201 = vsub.f32 %v850, %v1172
    %v1202 = vsub.f32 %v852, %v1174
    %v1203 = vsub.f32 %v854, %v1176
    %v1204 = vsub.f32 %v856, %v1178
    %v1205 = vsub.f32 %v858, %v1180
    %v1206 = vsub.f32 %v860, %v1182
    %v1207 = vsub.f32 %v862, %v1184
    %v1208 = vsub.f32 %v864, %v1186
    %v1209 = vsub.f32 %v866, %v1188
    %v1210 = vsub.f32 %v868, %v1190
    %v1211 = vsub.f32 %v870, %v1192
    %v1212 = vsub.f32 %v872, %v1194
    %v1213 = vsub.f32 %v874, %v1196
    %v1214 = vsub.f32 %v876, %v1198
    %v1215 = vadd.f32 %v1199, %v927
    %v1216 = vadd.f32 %v1200, %v930
    %v1217 = vadd.f32 %v1201, %v933
    %v1218 = vadd.f32 %v1202, %v936
    %v1219 = vadd.f32 %v1203, %v939
    %v1220 = vadd.f32 %v1204, %v942
    %v1221 = vadd.f32 %v1205, %v945
    %v1222 = vadd.f32 %v1206, %v948
    %v1223 = vadd.f32 %v1207, %v951
    %v1224 = vadd.f32 %v1208, %v954
    %v1225 = vadd.f32 %v1209, %v957
    %v1226 = vadd.f32 %v1210, %v960
    %v1227 = vadd.f32 %v1211, %v963
    %v1228 = vadd.f32 %v1212, %v966
    %v1229 = vadd.f32 %v1213, %v969
    %v1230 = vadd.f32 %v1214, %v972
    %vm1231 = vcmp.gt.f32.partialorder %v727, 0.0
    %vm1232 = vcmp.gt.f32.partialorder %v728, 0.0
    %vm1233 = vcmp.gt.f32.partialorder %v729, 0.0
    %vm1234 = vcmp.gt.f32.partialorder %v730, 0.0
    %vm1235 = vcmp.gt.f32.partialorder %v731, 0.0
    %vm1236 = vcmp.gt.f32.partialorder %v732, 0.0
    %vm1237 = vcmp.gt.f32.partialorder %v733, 0.0
    %vm1238 = vcmp.gt.f32.partialorder %v734, 0.0
    %vm1239 = vcmp.gt.f32.partialorder %v735, 0.0
    %vm1240 = vcmp.gt.f32.partialorder %v736, 0.0
    %vm1241 = vcmp.gt.f32.partialorder %v737, 0.0
    %vm1242 = vcmp.gt.f32.partialorder %v738, 0.0
    %vm1243 = vcmp.gt.f32.partialorder %v739, 0.0
    %vm1244 = vcmp.gt.f32.partialorder %v740, 0.0
    %vm1245 = vcmp.gt.f32.partialorder %v741, 0.0
    %vm1246 = vcmp.gt.f32.partialorder %v742, 0.0
    %v1247 = vsel %vm1231, %v1215, 1.0
    %v1248 = vsel %vm1232, %v1216, 1.0
    %v1249 = vsel %vm1233, %v1217, 1.0
    %v1250 = vsel %vm1234, %v1218, 1.0
    %v1251 = vsel %vm1235, %v1219, 1.0
    %v1252 = vsel %vm1236, %v1220, 1.0
    %v1253 = vsel %vm1237, %v1221, 1.0
    %v1254 = vsel %vm1238, %v1222, 1.0
    %v1255 = vsel %vm1239, %v1223, 1.0
    %v1256 = vsel %vm1240, %v1224, 1.0
    %v1257 = vsel %vm1241, %v1225, 1.0
    %v1258 = vsel %vm1242, %v1226, 1.0
    %v1259 = vsel %vm1243, %v1227, 1.0
    %v1260 = vsel %vm1244, %v1228, 1.0
    %v1261 = vsel %vm1245, %v1229, 1.0
    %v1262 = vsel %vm1246, %v1230, 1.0
    %s1263 = ssub.f32 %s39, 1.0
    %p1264 = scmp.gt.f32.partialorder %s1263, 0.0
    %s1265 = scalar_select %p1264, %s1263, 1.0
    %v1266 = vsub.f32 %v894, %v482
    %v1267 = vsub.f32 %v896, %v483
    %v1268 = vsub.f32 %v898, %v484
    %v1269 = vsub.f32 %v900, %v485
    %v1270 = vsub.f32 %v902, %v486
    %v1271 = vsub.f32 %v904, %v487
    %v1272 = vsub.f32 %v906, %v488
    %v1273 = vsub.f32 %v908, %v489
    %v1274 = vsub.f32 %v910, %v490
    %v1275 = vsub.f32 %v912, %v491
    %v1276 = vsub.f32 %v914, %v492
    %v1277 = vsub.f32 %v916, %v493
    %v1278 = vsub.f32 %v918, %v494
    %v1279 = vsub.f32 %v920, %v495
    %v1280 = vsub.f32 %v922, %v496
    %v1281 = vsub.f32 %v924, %v497
    %v1282 = vlog2.pop %v1247
    %v1283 = vmul.f32 %v1282, 0.6931472
    %v1284 = vlog2.pop %v1248
    %v1285 = vmul.f32 %v1284, 0.6931472
    %v1286 = vlog2.pop %v1249
    %v1287 = vmul.f32 %v1286, 0.6931472
    %v1288 = vlog2.pop %v1250
    %v1289 = vmul.f32 %v1288, 0.6931472
    %v1290 = vlog2.pop %v1251
    %v1291 = vmul.f32 %v1290, 0.6931472
    %v1292 = vlog2.pop %v1252
    %v1293 = vmul.f32 %v1292, 0.6931472
    %v1294 = vlog2.pop %v1253
    %v1295 = vmul.f32 %v1294, 0.6931472
    %v1296 = vlog2.pop %v1254
    %v1297 = vmul.f32 %v1296, 0.6931472
    %v1298 = vlog2.pop %v1255
    %v1299 = vmul.f32 %v1298, 0.6931472
    %v1300 = vlog2.pop %v1256
    %v1301 = vmul.f32 %v1300, 0.6931472
    %v1302 = vlog2.pop %v1257
    %v1303 = vmul.f32 %v1302, 0.6931472
    %v1304 = vlog2.pop %v1258
    %v1305 = vmul.f32 %v1304, 0.6931472
    %v1306 = vlog2.pop %v1259
    %v1307 = vmul.f32 %v1306, 0.6931472
    %v1308 = vlog2.pop %v1260
    %v1309 = vmul.f32 %v1308, 0.6931472
    %v1310 = vlog2.pop %v1261
    %v1311 = vmul.f32 %v1310, 0.6931472
    %v1312 = vlog2.pop %v1262
    %v1313 = vmul.f32 %v1312, 0.6931472
    %v1314 = vstv %s1263
    %v1315 = vmul.f32 %v1283, %v1314
    %v1316 = vmul.f32 %v1285, %v1314
    %v1317 = vmul.f32 %v1287, %v1314
    %v1318 = vmul.f32 %v1289, %v1314
    %v1319 = vmul.f32 %v1291, %v1314
    %v1320 = vmul.f32 %v1293, %v1314
    %v1321 = vmul.f32 %v1295, %v1314
    %v1322 = vmul.f32 %v1297, %v1314
    %v1323 = vmul.f32 %v1299, %v1314
    %v1324 = vmul.f32 %v1301, %v1314
    %v1325 = vmul.f32 %v1303, %v1314
    %v1326 = vmul.f32 %v1305, %v1314
    %v1327 = vmul.f32 %v1307, %v1314
    %v1328 = vmul.f32 %v1309, %v1314
    %v1329 = vmul.f32 %v1311, %v1314
    %v1330 = vmul.f32 %v1313, %v1314
    %v1331 = vsub.f32 %v1266, %v1315
    %v1332 = vsub.f32 %v1267, %v1316
    %v1333 = vsub.f32 %v1268, %v1317
    %v1334 = vsub.f32 %v1269, %v1318
    %v1335 = vsub.f32 %v1270, %v1319
    %v1336 = vsub.f32 %v1271, %v1320
    %v1337 = vsub.f32 %v1272, %v1321
    %v1338 = vsub.f32 %v1273, %v1322
    %v1339 = vsub.f32 %v1274, %v1323
    %v1340 = vsub.f32 %v1275, %v1324
    %v1341 = vsub.f32 %v1276, %v1325
    %v1342 = vsub.f32 %v1277, %v1326
    %v1343 = vsub.f32 %v1278, %v1327
    %v1344 = vsub.f32 %v1279, %v1328
    %v1345 = vsub.f32 %v1280, %v1329
    %v1346 = vsub.f32 %v1281, %v1330
    %v1347 = vstv %s1265
    %v1348 = vrcp.pop %v1347
    %v1349 = vmul.f32 %v1331, %v1348
    %v1350 = vmul.f32 %v1332, %v1348
    %v1351 = vmul.f32 %v1333, %v1348
    %v1352 = vmul.f32 %v1334, %v1348
    %v1353 = vmul.f32 %v1335, %v1348
    %v1354 = vmul.f32 %v1336, %v1348
    %v1355 = vmul.f32 %v1337, %v1348
    %v1356 = vmul.f32 %v1338, %v1348
    %v1357 = vmul.f32 %v1339, %v1348
    %v1358 = vmul.f32 %v1340, %v1348
    %v1359 = vmul.f32 %v1341, %v1348
    %v1360 = vmul.f32 %v1342, %v1348
    %v1361 = vmul.f32 %v1343, %v1348
    %v1362 = vmul.f32 %v1344, %v1348
    %v1363 = vmul.f32 %v1345, %v1348
    %v1364 = vmul.f32 %v1346, %v1348
    %v1365 = vsub.f32 0.0, %v1349
    %v1366 = vsub.f32 0.0, %v1350
    %v1367 = vsub.f32 0.0, %v1351
    %v1368 = vsub.f32 0.0, %v1352
    %v1369 = vsub.f32 0.0, %v1353
    %v1370 = vsub.f32 0.0, %v1354
    %v1371 = vsub.f32 0.0, %v1355
    %v1372 = vsub.f32 0.0, %v1356
    %v1373 = vsub.f32 0.0, %v1357
    %v1374 = vsub.f32 0.0, %v1358
    %v1375 = vsub.f32 0.0, %v1359
    %v1376 = vsub.f32 0.0, %v1360
    %v1377 = vsub.f32 0.0, %v1361
    %v1378 = vsub.f32 0.0, %v1362
    %v1379 = vsub.f32 0.0, %v1363
    %v1380 = vsub.f32 0.0, %v1364
    %v1381 = vmul.f32 %v1365, %v727
    %v1382 = vmul.f32 %v1366, %v728
    %v1383 = vmul.f32 %v1367, %v729
    %v1384 = vmul.f32 %v1368, %v730
    %v1385 = vmul.f32 %v1369, %v731
    %v1386 = vmul.f32 %v1370, %v732
    %v1387 = vmul.f32 %v1371, %v733
    %v1388 = vmul.f32 %v1372, %v734
    %v1389 = vmul.f32 %v1373, %v735
    %v1390 = vmul.f32 %v1374, %v736
    %v1391 = vmul.f32 %v1375, %v737
    %v1392 = vmul.f32 %v1376, %v738
    %v1393 = vmul.f32 %v1377, %v739
    %v1394 = vmul.f32 %v1378, %v740
    %v1395 = vmul.f32 %v1379, %v741
    %v1396 = vmul.f32 %v1380, %v742
    %vm1397 = vcmask 7168
    %v1398 = vsel %vm1397, %v1381, 0.0
    %v1399 = vsel %vm1397, %v1382, 0.0
    %v1400 = vadd.f32 %v1398, %v1399
    %v1401 = vsel %vm1397, %v1383, 0.0
    %v1402 = vadd.f32 %v1400, %v1401
    %v1403 = vsel %vm1397, %v1384, 0.0
    %v1404 = vadd.f32 %v1402, %v1403
    %v1405 = vsel %vm1397, %v1385, 0.0
    %v1406 = vadd.f32 %v1404, %v1405
    %v1407 = vsel %vm1397, %v1386, 0.0
    %v1408 = vadd.f32 %v1406, %v1407
    %v1409 = vsel %vm1397, %v1387, 0.0
    %v1410 = vadd.f32 %v1408, %v1409
    %v1411 = vsel %vm1397, %v1388, 0.0
    %v1412 = vadd.f32 %v1410, %v1411
    %v1413 = vsel %vm1397, %v1389, 0.0
    %v1414 = vadd.f32 %v1412, %v1413
    %v1415 = vsel %vm1397, %v1390, 0.0
    %v1416 = vadd.f32 %v1414, %v1415
    %v1417 = vsel %vm1397, %v1391, 0.0
    %v1418 = vadd.f32 %v1416, %v1417
    %v1419 = vsel %vm1397, %v1392, 0.0
    %v1420 = vadd.f32 %v1418, %v1419
    %v1421 = vsel %vm1397, %v1393, 0.0
    %v1422 = vadd.f32 %v1420, %v1421
    %v1423 = vsel %vm1397, %v1394, 0.0
    %v1424 = vadd.f32 %v1422, %v1423
    %v1425 = vsel %vm1397, %v1395, 0.0
    %v1426 = vadd.f32 %v1424, %v1425
    %v1427 = vsel %vm1397, %v1396, 0.0
    %v1428 = vadd.f32 %v1426, %v1427
    %1429 = vadd.xlane.f32.xlu0 %v1428
    %v1430 = vpop.xlane.xlu0 %1429
    %v1431 = vrot.slane %v1430, 4
    %v1432 = vadd.f32 %v1430, %v1431
    %v1433 = vrot.slane %v1432, 2
    %v1434 = vadd.f32 %v1432, %v1433
    %v1435 = vrot.slane %v1434, 1
    %v1436 = vadd.f32 %v1434, %v1435
    %s1437 = vtos %v1436
    %p1438 = scmp.gt.s32.totalorder %s38, 1
    %s1439 = scalar_select %p1438, %s1437, 0.0
    %v1440 = vadd.f32 %v846, %v1007
    %v1441 = vadd.f32 %v848, %v1010
    %v1442 = vadd.f32 %v850, %v1013
    %v1443 = vadd.f32 %v852, %v1016
    %v1444 = vadd.f32 %v854, %v1019
    %v1445 = vadd.f32 %v856, %v1022
    %v1446 = vadd.f32 %v858, %v1025
    %v1447 = vadd.f32 %v860, %v1028
    %v1448 = vadd.f32 %v862, %v1031
    %v1449 = vadd.f32 %v864, %v1034
    %v1450 = vadd.f32 %v866, %v1037
    %v1451 = vadd.f32 %v868, %v1040
    %v1452 = vadd.f32 %v870, %v1043
    %v1453 = vadd.f32 %v872, %v1046
    %v1454 = vadd.f32 %v874, %v1049
    %v1455 = vadd.f32 %v876, %v1052
    %v1456 = vlog2.pop %v1440
    %v1457 = vmul.f32 %v1456, 0.6931472
    %v1458 = vlog2.pop %v1441
    %v1459 = vmul.f32 %v1458, 0.6931472
    %v1460 = vlog2.pop %v1442
    %v1461 = vmul.f32 %v1460, 0.6931472
    %v1462 = vlog2.pop %v1443
    %v1463 = vmul.f32 %v1462, 0.6931472
    %v1464 = vlog2.pop %v1444
    %v1465 = vmul.f32 %v1464, 0.6931472
    %v1466 = vlog2.pop %v1445
    %v1467 = vmul.f32 %v1466, 0.6931472
    %v1468 = vlog2.pop %v1446
    %v1469 = vmul.f32 %v1468, 0.6931472
    %v1470 = vlog2.pop %v1447
    %v1471 = vmul.f32 %v1470, 0.6931472
    %v1472 = vlog2.pop %v1448
    %v1473 = vmul.f32 %v1472, 0.6931472
    %v1474 = vlog2.pop %v1449
    %v1475 = vmul.f32 %v1474, 0.6931472
    %v1476 = vlog2.pop %v1450
    %v1477 = vmul.f32 %v1476, 0.6931472
    %v1478 = vlog2.pop %v1451
    %v1479 = vmul.f32 %v1478, 0.6931472
    %v1480 = vlog2.pop %v1452
    %v1481 = vmul.f32 %v1480, 0.6931472
    %v1482 = vlog2.pop %v1453
    %v1483 = vmul.f32 %v1482, 0.6931472
    %v1484 = vlog2.pop %v1454
    %v1485 = vmul.f32 %v1484, 0.6931472
    %v1486 = vlog2.pop %v1455
    %v1487 = vmul.f32 %v1486, 0.6931472
    %v1488 = vsub.f32 %v1121, %v1457
    %v1489 = vsub.f32 %v1124, %v1459
    %v1490 = vsub.f32 %v1127, %v1461
    %v1491 = vsub.f32 %v1130, %v1463
    %v1492 = vsub.f32 %v1133, %v1465
    %v1493 = vsub.f32 %v1136, %v1467
    %v1494 = vsub.f32 %v1139, %v1469
    %v1495 = vsub.f32 %v1142, %v1471
    %v1496 = vsub.f32 %v1145, %v1473
    %v1497 = vsub.f32 %v1148, %v1475
    %v1498 = vsub.f32 %v1151, %v1477
    %v1499 = vsub.f32 %v1154, %v1479
    %v1500 = vsub.f32 %v1157, %v1481
    %v1501 = vsub.f32 %v1160, %v1483
    %v1502 = vsub.f32 %v1163, %v1485
    %v1503 = vsub.f32 %v1166, %v1487
    %v1504 = vsub.f32 0.0, %v1488
    %v1505 = vsub.f32 0.0, %v1489
    %v1506 = vsub.f32 0.0, %v1490
    %v1507 = vsub.f32 0.0, %v1491
    %v1508 = vsub.f32 0.0, %v1492
    %v1509 = vsub.f32 0.0, %v1493
    %v1510 = vsub.f32 0.0, %v1494
    %v1511 = vsub.f32 0.0, %v1495
    %v1512 = vsub.f32 0.0, %v1496
    %v1513 = vsub.f32 0.0, %v1497
    %v1514 = vsub.f32 0.0, %v1498
    %v1515 = vsub.f32 0.0, %v1499
    %v1516 = vsub.f32 0.0, %v1500
    %v1517 = vsub.f32 0.0, %v1501
    %v1518 = vsub.f32 0.0, %v1502
    %v1519 = vsub.f32 0.0, %v1503
    %v1520 = vmul.f32 %v1504, %v775
    %v1521 = vmul.f32 %v1505, %v776
    %v1522 = vmul.f32 %v1506, %v777
    %v1523 = vmul.f32 %v1507, %v778
    %v1524 = vmul.f32 %v1508, %v779
    %v1525 = vmul.f32 %v1509, %v780
    %v1526 = vmul.f32 %v1510, %v781
    %v1527 = vmul.f32 %v1511, %v782
    %v1528 = vmul.f32 %v1512, %v783
    %v1529 = vmul.f32 %v1513, %v784
    %v1530 = vmul.f32 %v1514, %v785
    %v1531 = vmul.f32 %v1515, %v786
    %v1532 = vmul.f32 %v1516, %v787
    %v1533 = vmul.f32 %v1517, %v788
    %v1534 = vmul.f32 %v1518, %v789
    %v1535 = vmul.f32 %v1519, %v790
    %v1536 = vsel %vm1397, %v1520, 0.0
    %v1537 = vsel %vm1397, %v1521, 0.0
    %v1538 = vadd.f32 %v1536, %v1537
    %v1539 = vsel %vm1397, %v1522, 0.0
    %v1540 = vadd.f32 %v1538, %v1539
    %v1541 = vsel %vm1397, %v1523, 0.0
    %v1542 = vadd.f32 %v1540, %v1541
    %v1543 = vsel %vm1397, %v1524, 0.0
    %v1544 = vadd.f32 %v1542, %v1543
    %v1545 = vsel %vm1397, %v1525, 0.0
    %v1546 = vadd.f32 %v1544, %v1545
    %v1547 = vsel %vm1397, %v1526, 0.0
    %v1548 = vadd.f32 %v1546, %v1547
    %v1549 = vsel %vm1397, %v1527, 0.0
    %v1550 = vadd.f32 %v1548, %v1549
    %v1551 = vsel %vm1397, %v1528, 0.0
    %v1552 = vadd.f32 %v1550, %v1551
    %v1553 = vsel %vm1397, %v1529, 0.0
    %v1554 = vadd.f32 %v1552, %v1553
    %v1555 = vsel %vm1397, %v1530, 0.0
    %v1556 = vadd.f32 %v1554, %v1555
    %v1557 = vsel %vm1397, %v1531, 0.0
    %v1558 = vadd.f32 %v1556, %v1557
    %v1559 = vsel %vm1397, %v1532, 0.0
    %v1560 = vadd.f32 %v1558, %v1559
    %v1561 = vsel %vm1397, %v1533, 0.0
    %v1562 = vadd.f32 %v1560, %v1561
    %v1563 = vsel %vm1397, %v1534, 0.0
    %v1564 = vadd.f32 %v1562, %v1563
    %v1565 = vsel %vm1397, %v1535, 0.0
    %v1566 = vadd.f32 %v1564, %v1565
    %1567 = vadd.xlane.f32.xlu0 %v1566
    %v1568 = vpop.xlane.xlu0 %1567
    %v1569 = vrot.slane %v1568, 4
    %v1570 = vadd.f32 %v1568, %v1569
    %v1571 = vrot.slane %v1570, 2
    %v1572 = vadd.f32 %v1570, %v1571
    %v1573 = vrot.slane %v1572, 1
    %v1574 = vadd.f32 %v1572, %v1573
    %s1575 = vtos %v1574
    %p1576 = scmp.gt.s32.totalorder %s36, 0
    %s1577 = scalar_select %p1576, %s37, 1.0
    %s1578 = sadd.f32 %s1439, %s1575
    %v1579 = vstv %s1577
    %v1580 = vrcp.pop %v1579
    %s1581 = vtos %v1580
    %s1582 = smul.f32 %s1578, %s1581
    %v1583 = vstv %s1582
    %1584 = vst [vmem:[%s7] sm:$0xff] %v1583
  $region25: #{supcon_loss_with_prototype.1} parent=0 // pred_fallthru
    _
  // Predicated region
  $region26: #{supcon_loss_with_prototype.1} parent=0 // pred_check
    _
  $region27: #{supcon_loss_with_prototype.1} parent=0 // pred_check_branch
    %1586 = sbr.rel (0) target = $region29
  $region28: #{supcon_loss_with_prototype.1} parent=0 // pred_region
    _
  $region29: #{supcon_loss_with_prototype.1} parent=0 // pred_fallthru
    _
  // Predicated region
  $region30: #{supcon_loss_with_prototype.1} parent=0 // pred_check
    _
  $region31: #{supcon_loss_with_prototype.1} parent=0 // pred_check_branch
    %1588 = sbr.rel (0) target = $region33
  $region32: #{supcon_loss_with_prototype.1} parent=0 // pred_region
    _
  $region33: #{supcon_loss_with_prototype.1} parent=0 // pred_fallthru
    _

</llo_original>
